<compile_context>
chip_gen: v6e
topology: v6e:2x2x1
jax: 0.10.0
libtpu: 0.0.40
codegen_flags: <defaults>
</compile_context>

<pallas_src>
import jax
import jax.numpy as jnp
import numpy as np
from jax import lax
from jax.experimental import pallas as pl
from jax.experimental.pallas import tpu as pltpu

_VMEM = pltpu.MemorySpace.VMEM


# ----------------------------------------------------------------------------
# Fused decoder kernel
# ----------------------------------------------------------------------------
def _make_decoder_kernel(*, edl, batch, seq_len, in_dim, hidden_dims, out_dim,
                         h_activ):
    """Build the fused (edl + stacked LSTM + dense) kernel for fixed shapes."""
    num_layers = len(hidden_dims)
    B, T = batch, seq_len

    def kernel(*refs):
        x_ref = refs[0]
        w_refs = refs[1:1 + 3 * num_layers]            # (wih, whh, b) per layer
        dense_ref = refs[1 + 3 * num_layers]
        out_ref = refs[2 + 3 * num_layers]

        # ---- edl preprocessing: single merged selection matmul --------------
        x = x_ref[...]                                  # (B, 2*in_dim) or (B, in_dim)
        if edl:
            D = in_dim
            a = x + 1.0
            rows = lax.broadcasted_iota(jnp.int32, (2 * D, 2 * D), 0)
            cols = lax.broadcasted_iota(jnp.int32, (2 * D, 2 * D), 1)
            # columns 0:D pick the even elements, columns D:2D sum even+odd.
            num_sel = (cols < D) & (rows == 2 * cols)
            den_sel = (cols >= D) & ((rows == 2 * (cols - D)) |
                                     (rows == 2 * (cols - D) + 1))
            sel = (num_sel | den_sel).astype(jnp.float32)
            packed = jnp.dot(a, sel, preferred_element_type=jnp.float32)
            a_even = packed[:, 0:D]
            denom = packed[:, D:2 * D]
            x = a_even * pl.reciprocal(denom, approx=False)   # (B, in_dim)

        # ---- stacked LSTM layers (all values stay in vregs) -----------------
        layer_rows = None                               # list of T (B, H_prev) arrays
        for l in range(num_layers):
            H = hidden_dims[l]
            wih = w_refs[3 * l][...]
            whh = w_refs[3 * l + 1][...]
            b = w_refs[3 * l + 2][...]

            if l == 0:
                # repeat_interleave => layer-0 input identical for every t:
                # compute the projection (+ bias) exactly once.
                proj_const = jnp.dot(x, wih,
                                     preferred_element_type=jnp.float32) + b
                proj_rows = [proj_const] * T            # (B, 4H) reused T times
            else:
                # One bulk projection for all timesteps of this layer.
                prev = jnp.concatenate(layer_rows, axis=0)   # (T*B, H_prev)
                if h_activ:
                    prev = jax.nn.sigmoid(prev)         # bulk inter-layer activation
                proj_all = jnp.dot(prev, wih,
                                   preferred_element_type=jnp.float32) + b
                proj_rows = [proj_all[t * B:(t + 1) * B, :] for t in range(T)]

            h = jnp.zeros((B, H), jnp.float32)
            c = jnp.zeros((B, H), jnp.float32)
            outs = []
            # TODO(synk): if T grows beyond ~8-16, switch to lax.fori_loop with
            # (h, c) carries (keeping the hoisted projections) to bound vreg
            # live ranges instead of full static unroll.
            # TODO(synk): for larger T, hold W_hh stationary in the MXU via
            # pltpu.matmul_push_rhs / matmul_acc_lhs / matmul_pop instead of
            # re-pushing the same RHS every step.
            for t in range(T):
                gates = proj_rows[t] + jnp.dot(
                    h, whh, preferred_element_type=jnp.float32)
                # Kernel gate order (i, f, o, g): one wide sigmoid, one tanh.
                sig = jax.nn.sigmoid(gates[:, 0:3 * H])
                i_g = sig[:, 0:H]
                f_g = sig[:, H:2 * H]
                o_g = sig[:, 2 * H:3 * H]
                g_g = jnp.tanh(gates[:, 3 * H:4 * H])
                c = f_g * c + i_g * g_g
                h = o_g * jnp.tanh(c)
                outs.append(h)
            layer_rows = outs

        # ---- fused final dense + single contiguous output store -------------
        y_last = jnp.concatenate(layer_rows, axis=0)    # (T*B, H_last)
        out_all = jnp.dot(y_last, dense_ref[...],
                          preferred_element_type=jnp.float32)  # (T*B, out_dim)
        out_ref[...] = out_all                          # one slab store

    return kernel


# ----------------------------------------------------------------------------
# Decoder module (parameter container + forward using one fused pallas_call)
# ----------------------------------------------------------------------------
class DecoderPallas:
    def __init__(self, input_dim, out_dim, edl, h_dims, h_activ, key):
        self.edl = edl
        self.h_activ = bool(h_activ)   # truthy -> sigmoid applied between layers
        self.input_dim = input_dim
        self.out_dim = out_dim
        layer_dims = [input_dim] + list(h_dims) + [h_dims[-1]]
        self.hidden_dims = layer_dims[1:]
        self.num_layers = len(layer_dims) - 1

        # PyTorch gate order (i, f, g, o) for the reference; kernel copies use
        # (i, f, o, g) so the three sigmoid gates are lane-contiguous.
        self.w_ih, self.w_hh, self.b = [], [], []
        self.w_ih_k, self.w_hh_k, self.b_k = [], [], []
        keys = jax.random.split(key, 4 * self.num_layers + 1)
        for idx in range(self.num_layers):
            d_in, H = layer_dims[idx], layer_dims[idx + 1]
            k = 1.0 / np.sqrt(H)   # PyTorch LSTM default init U(-1/sqrt(H), 1/sqrt(H))
            kw0, kw1, kb0, kb1 = keys[4 * idx:4 * idx + 4]
            w_ih = jax.random.uniform(kw0, (d_in, 4 * H), jnp.float32, -k, k)
            w_hh = jax.random.uniform(kw1, (H, 4 * H), jnp.float32, -k, k)
            b_ih = jax.random.uniform(kb0, (4 * H,), jnp.float32, -k, k)
            b_hh = jax.random.uniform(kb1, (4 * H,), jnp.float32, -k, k)
            bias = (b_ih + b_hh).reshape(1, 4 * H)
            self.w_ih.append(w_ih)
            self.w_hh.append(w_hh)
            self.b.append(bias)

            # (i, f, g, o) -> (i, f, o, g) column permutation on the 4H axis.
            perm = np.concatenate([np.arange(0, H), np.arange(H, 2 * H),
                                   np.arange(3 * H, 4 * H),
                                   np.arange(2 * H, 3 * H)])
            # TODO(synk): cast kernel-side weights to bfloat16 for single-pass
            # MXU on v6e/v7x (needs relaxed tolerance vs the f32 reference).
            self.w_ih_k.append(w_ih[:, perm])
            self.w_hh_k.append(w_hh[:, perm])
            self.b_k.append(bias[:, perm])

        # torch.rand -> U[0, 1)
        self.dense_matrix = jax.random.uniform(
            keys[-1], (layer_dims[-1], out_dim), jnp.float32, 0.0, 1.0
        )

    def forward(self, x, seq_len=2):
        B = x.shape[0]
        T = seq_len

        # Pad the batch to a full sublane tile so every vreg / MXU operand row
        # dimension is fully occupied; padded rows are sliced off afterwards.
        B_pad = max(8, ((B + 7) // 8) * 8)
        if B_pad != B:
            x = jnp.pad(x, ((0, B_pad - B), (0, 0)))

        kernel = _make_decoder_kernel(
            edl=self.edl, batch=B_pad, seq_len=T, in_dim=self.input_dim,
            hidden_dims=tuple(self.hidden_dims), out_dim=self.out_dim,
            h_activ=self.h_activ,
        )

        args = [x]
        for l in range(self.num_layers):
            args += [self.w_ih_k[l], self.w_hh_k[l], self.b_k[l]]
        args.append(self.dense_matrix)

        # Single fused, grid-less kernel; everything resident in VMEM.
        # TODO(synk): if B grows, add a leading grid axis over B-tiles with
        # dimension_semantics=("parallel",) (v7x megacore) and set an explicit
        # vmem_limit_bytes once resident weights approach the scoped limit
        # (16 MiB default on v5e, 32/64 MiB on v7x).
        out_flat = pl.pallas_call(
            kernel,
            out_shape=jax.ShapeDtypeStruct((T * B_pad, self.out_dim),
                                           jnp.float32),
            in_specs=[pl.BlockSpec(memory_space=_VMEM)] * len(args),
            out_specs=pl.BlockSpec(memory_space=_VMEM),
        )(*args)

        # Lane-dense flat kernel output -> (B, T, out_dim) via XLA transpose.
        out = out_flat.reshape(T, B_pad, self.out_dim).transpose(1, 0, 2)
        return out[:B]


# ----------------------------------------------------------------------------
# Pure-JAX reference (mirrors the PyTorch semantics) for a correctness check
# ----------------------------------------------------------------------------
def _reference_forward(model, x, seq_len):
    if model.edl:
        alpha = x + 1.0
        even = alpha[:, 0::2]
        odd = alpha[:, 1::2]
        x = even / (even + odd)
    x = jnp.repeat(x[:, None, :], seq_len, axis=1)
    for idx in range(model.num_layers):
        w_ih, w_hh, b = model.w_ih[idx], model.w_hh[idx], model.b[idx]
        B, Tt, _ = x.shape
        H = w_hh.shape[0]
        h = jnp.zeros((B, H), jnp.float32)
        c = jnp.zeros((B, H), jnp.float32)
        ys = []
        for t in range(Tt):
            gates = x[:, t] @ w_ih + h @ w_hh + b
            i = jax.nn.sigmoid(gates[:, 0:H])
            f = jax.nn.sigmoid(gates[:, H:2 * H])
            g = jnp.tanh(gates[:, 2 * H:3 * H])
            o = jax.nn.sigmoid(gates[:, 3 * H:4 * H])
            c = f * c + i * g
            h = o * jnp.tanh(c)
            ys.append(h)
        x = jnp.stack(ys, axis=1)
        if model.h_activ and idx < model.num_layers - 1:
            x = jax.nn.sigmoid(x)
    return x @ model.dense_matrix


# ----------------------------------------------------------------------------
if __name__ == "__main__":
    key = jax.random.PRNGKey(0)
    k_param, k_x = jax.random.split(key)

    # Small, forward-consistent shapes.
    batch = 2
    input_dim = 8          # LSTM-0 input size (post-edl feature count)
    h_dims = [16, 8]
    out_dim = 4
    edl = True
    seq_len = 4
    h_activ = True         # corresponds to passing nn.Sigmoid() as h_activ

    model = DecoderPallas(input_dim, out_dim, edl, h_dims, h_activ, k_param)

    # edl=True halves the feature dim, so the raw input has 2*input_dim features.
    x = jax.random.uniform(k_x, (batch, 2 * input_dim), jnp.float32)

    out = model.forward(x, seq_len=seq_len)
    out = jax.block_until_ready(out)

    ref = jax.block_until_ready(_reference_forward(model, x, seq_len))

    assert out.shape == (batch, seq_len, out_dim), out.shape
    assert np.allclose(np.asarray(out), np.asarray(ref), rtol=1e-4, atol=1e-4), (
        "Pallas output does not match reference"
    )
    print("KERNEL_OK")
</pallas_src>

<mosaic_0001>
module attributes {stable_mosaic.version = 11 : i64} {
  func.func @kernel(%arg0: memref<8x16xf32, #tpu.memory_space<vmem>>, %arg1: memref<8x64xf32, #tpu.memory_space<vmem>>, %arg2: memref<16x64xf32, #tpu.memory_space<vmem>>, %arg3: memref<1x64xf32, #tpu.memory_space<vmem>>, %arg4: memref<16x32xf32, #tpu.memory_space<vmem>>, %arg5: memref<8x32xf32, #tpu.memory_space<vmem>>, %arg6: memref<1x32xf32, #tpu.memory_space<vmem>>, %arg7: memref<8x32xf32, #tpu.memory_space<vmem>>, %arg8: memref<8x32xf32, #tpu.memory_space<vmem>>, %arg9: memref<1x32xf32, #tpu.memory_space<vmem>>, %arg10: memref<8x4xf32, #tpu.memory_space<vmem>>, %arg11: memref<32x4xf32, #tpu.memory_space<vmem>>) attributes {dimension_semantics = [], scalar_prefetch = 0 : i64, scratch_operands = 0 : i64, tpu.core_type = #tpu.core_type<tc>} {
    %c0 = arith.constant 0 : index
    %c0_0 = arith.constant 0 : index
    %0 = vector.load %arg0[%c0, %c0_0] : memref<8x16xf32, #tpu.memory_space<vmem>>, vector<8x16xf32>
    %cst = arith.constant 1.000000e+00 : f32
    %1 = vector.broadcast %cst : f32 to vector<8x16xf32>
    %2 = arith.addf %0, %1 : vector<8x16xf32>
    %3 = tpu.iota {dimensions = array<i32: 0>} : vector<16x16xi32>
    %4 = tpu.iota {dimensions = array<i32: 1>} : vector<16x16xi32>
    %c8_i32 = arith.constant 8 : i32
    %5 = vector.broadcast %c8_i32 : i32 to vector<16x16xi32>
    %6 = arith.cmpi slt, %4, %5 : vector<16x16xi32>
    %c2_i32 = arith.constant 2 : i32
    %7 = vector.broadcast %c2_i32 : i32 to vector<16x16xi32>
    %8 = arith.muli %7, %4 : vector<16x16xi32>
    %9 = arith.cmpi eq, %3, %8 : vector<16x16xi32>
    %10 = arith.andi %6, %9 : vector<16x16xi1>
    %c8_i32_1 = arith.constant 8 : i32
    %11 = vector.broadcast %c8_i32_1 : i32 to vector<16x16xi32>
    %12 = arith.cmpi sge, %4, %11 : vector<16x16xi32>
    %c8_i32_2 = arith.constant 8 : i32
    %13 = vector.broadcast %c8_i32_2 : i32 to vector<16x16xi32>
    %14 = arith.subi %4, %13 : vector<16x16xi32>
    %c2_i32_3 = arith.constant 2 : i32
    %15 = vector.broadcast %c2_i32_3 : i32 to vector<16x16xi32>
    %16 = arith.muli %15, %14 : vector<16x16xi32>
    %17 = arith.cmpi eq, %3, %16 : vector<16x16xi32>
    %c8_i32_4 = arith.constant 8 : i32
    %18 = vector.broadcast %c8_i32_4 : i32 to vector<16x16xi32>
    %19 = arith.subi %4, %18 : vector<16x16xi32>
    %c2_i32_5 = arith.constant 2 : i32
    %20 = vector.broadcast %c2_i32_5 : i32 to vector<16x16xi32>
    %21 = arith.muli %20, %19 : vector<16x16xi32>
    %c1_i32 = arith.constant 1 : i32
    %22 = vector.broadcast %c1_i32 : i32 to vector<16x16xi32>
    %23 = arith.addi %21, %22 : vector<16x16xi32>
    %24 = arith.cmpi eq, %3, %23 : vector<16x16xi32>
    %25 = arith.ori %17, %24 : vector<16x16xi1>
    %26 = arith.andi %12, %25 : vector<16x16xi1>
    %27 = arith.ori %10, %26 : vector<16x16xi1>
    %28 = arith.extui %27 : vector<16x16xi1> to vector<16x16xi32>
    %29 = arith.sitofp %28 : vector<16x16xi32> to vector<16x16xf32>
    %cst_6 = arith.constant dense<0.000000e+00> : vector<8x16xf32>
    %30 = tpu.matmul %2, %29, %cst_6 {dimension_numbers = #tpu.dot_dimension_numbers<[1], [0], [0], [1], [0, 0, 1, 1], [], []>} : vector<8x16xf32>, vector<16x16xf32>, vector<8x16xf32> -> vector<8x16xf32>
    %31 = vector.extract_strided_slice %30 {offsets = [0, 0], sizes = [8, 8], strides = [1, 1]} : vector<8x16xf32> to vector<8x8xf32>
    %32 = vector.extract_strided_slice %30 {offsets = [0, 8], sizes = [8, 8], strides = [1, 1]} : vector<8x16xf32> to vector<8x8xf32>
    %33 = tpu.reciprocal %32 : vector<8x8xf32> -> vector<8x8xf32>
    %34 = arith.mulf %31, %33 : vector<8x8xf32>
    %c0_7 = arith.constant 0 : index
    %c0_8 = arith.constant 0 : index
    %35 = vector.load %arg1[%c0_7, %c0_8] : memref<8x64xf32, #tpu.memory_space<vmem>>, vector<8x64xf32>
    %c0_9 = arith.constant 0 : index
    %c0_10 = arith.constant 0 : index
    %36 = vector.load %arg2[%c0_9, %c0_10] : memref<16x64xf32, #tpu.memory_space<vmem>>, vector<16x64xf32>
    %c0_11 = arith.constant 0 : index
    %c0_12 = arith.constant 0 : index
    %37 = vector.load %arg3[%c0_11, %c0_12] : memref<1x64xf32, #tpu.memory_space<vmem>>, vector<1x64xf32>
    %cst_13 = arith.constant dense<0.000000e+00> : vector<8x64xf32>
    %38 = tpu.matmul %34, %35, %cst_13 {dimension_numbers = #tpu.dot_dimension_numbers<[1], [0], [0], [1], [0, 0, 1, 1], [], []>} : vector<8x8xf32>, vector<8x64xf32>, vector<8x64xf32> -> vector<8x64xf32>
    %39 = vector.broadcast %37 : vector<1x64xf32> to vector<8x64xf32>
    %40 = arith.addf %38, %39 : vector<8x64xf32>
    %cst_14 = arith.constant 0.000000e+00 : f32
    %41 = vector.broadcast %cst_14 : f32 to vector<8x16xf32>
    %cst_15 = arith.constant 0.000000e+00 : f32
    %42 = vector.broadcast %cst_15 : f32 to vector<8x16xf32>
    %cst_16 = arith.constant dense<0.000000e+00> : vector<8x64xf32>
    %43 = tpu.matmul %41, %36, %cst_16 {dimension_numbers = #tpu.dot_dimension_numbers<[1], [0], [0], [1], [0, 0, 1, 1], [], []>} : vector<8x16xf32>, vector<16x64xf32>, vector<8x64xf32> -> vector<8x64xf32>
    %44 = arith.addf %40, %43 : vector<8x64xf32>
    %45 = vector.extract_strided_slice %44 {offsets = [0, 0], sizes = [8, 48], strides = [1, 1]} : vector<8x64xf32> to vector<8x48xf32>
    %46 = arith.negf %45 : vector<8x48xf32>
    %47 = math.exp %46 : vector<8x48xf32>
    %cst_17 = arith.constant 1.000000e+00 : f32
    %48 = vector.broadcast %cst_17 : f32 to vector<8x48xf32>
    %49 = arith.addf %48, %47 : vector<8x48xf32>
    %50 = arith.divf %48, %49 : vector<8x48xf32>
    %51 = vector.extract_strided_slice %50 {offsets = [0, 0], sizes = [8, 16], strides = [1, 1]} : vector<8x48xf32> to vector<8x16xf32>
    %52 = vector.extract_strided_slice %50 {offsets = [0, 16], sizes = [8, 16], strides = [1, 1]} : vector<8x48xf32> to vector<8x16xf32>
    %53 = vector.extract_strided_slice %50 {offsets = [0, 32], sizes = [8, 16], strides = [1, 1]} : vector<8x48xf32> to vector<8x16xf32>
    %54 = vector.extract_strided_slice %44 {offsets = [0, 48], sizes = [8, 16], strides = [1, 1]} : vector<8x64xf32> to vector<8x16xf32>
    %55 = math.tanh %54 : vector<8x16xf32>
    %56 = arith.mulf %52, %42 : vector<8x16xf32>
    %57 = arith.mulf %51, %55 : vector<8x16xf32>
    %58 = arith.addf %56, %57 : vector<8x16xf32>
    %59 = math.tanh %58 : vector<8x16xf32>
    %60 = arith.mulf %53, %59 : vector<8x16xf32>
    %cst_18 = arith.constant dense<0.000000e+00> : vector<8x64xf32>
    %61 = tpu.matmul %60, %36, %cst_18 {dimension_numbers = #tpu.dot_dimension_numbers<[1], [0], [0], [1], [0, 0, 1, 1], [], []>} : vector<8x16xf32>, vector<16x64xf32>, vector<8x64xf32> -> vector<8x64xf32>
    %62 = arith.addf %40, %61 : vector<8x64xf32>
    %63 = vector.extract_strided_slice %62 {offsets = [0, 0], sizes = [8, 48], strides = [1, 1]} : vector<8x64xf32> to vector<8x48xf32>
    %64 = arith.negf %63 : vector<8x48xf32>
    %65 = math.exp %64 : vector<8x48xf32>
    %cst_19 = arith.constant 1.000000e+00 : f32
    %66 = vector.broadcast %cst_19 : f32 to vector<8x48xf32>
    %67 = arith.addf %66, %65 : vector<8x48xf32>
    %68 = arith.divf %66, %67 : vector<8x48xf32>
    %69 = vector.extract_strided_slice %68 {offsets = [0, 0], sizes = [8, 16], strides = [1, 1]} : vector<8x48xf32> to vector<8x16xf32>
    %70 = vector.extract_strided_slice %68 {offsets = [0, 16], sizes = [8, 16], strides = [1, 1]} : vector<8x48xf32> to vector<8x16xf32>
    %71 = vector.extract_strided_slice %68 {offsets = [0, 32], sizes = [8, 16], strides = [1, 1]} : vector<8x48xf32> to vector<8x16xf32>
    %72 = vector.extract_strided_slice %62 {offsets = [0, 48], sizes = [8, 16], strides = [1, 1]} : vector<8x64xf32> to vector<8x16xf32>
    %73 = math.tanh %72 : vector<8x16xf32>
    %74 = arith.mulf %70, %58 : vector<8x16xf32>
    %75 = arith.mulf %69, %73 : vector<8x16xf32>
    %76 = arith.addf %74, %75 : vector<8x16xf32>
    %77 = math.tanh %76 : vector<8x16xf32>
    %78 = arith.mulf %71, %77 : vector<8x16xf32>
    %cst_20 = arith.constant dense<0.000000e+00> : vector<8x64xf32>
    %79 = tpu.matmul %78, %36, %cst_20 {dimension_numbers = #tpu.dot_dimension_numbers<[1], [0], [0], [1], [0, 0, 1, 1], [], []>} : vector<8x16xf32>, vector<16x64xf32>, vector<8x64xf32> -> vector<8x64xf32>
    %80 = arith.addf %40, %79 : vector<8x64xf32>
    %81 = vector.extract_strided_slice %80 {offsets = [0, 0], sizes = [8, 48], strides = [1, 1]} : vector<8x64xf32> to vector<8x48xf32>
    %82 = arith.negf %81 : vector<8x48xf32>
    %83 = math.exp %82 : vector<8x48xf32>
    %cst_21 = arith.constant 1.000000e+00 : f32
    %84 = vector.broadcast %cst_21 : f32 to vector<8x48xf32>
    %85 = arith.addf %84, %83 : vector<8x48xf32>
    %86 = arith.divf %84, %85 : vector<8x48xf32>
    %87 = vector.extract_strided_slice %86 {offsets = [0, 0], sizes = [8, 16], strides = [1, 1]} : vector<8x48xf32> to vector<8x16xf32>
    %88 = vector.extract_strided_slice %86 {offsets = [0, 16], sizes = [8, 16], strides = [1, 1]} : vector<8x48xf32> to vector<8x16xf32>
    %89 = vector.extract_strided_slice %86 {offsets = [0, 32], sizes = [8, 16], strides = [1, 1]} : vector<8x48xf32> to vector<8x16xf32>
    %90 = vector.extract_strided_slice %80 {offsets = [0, 48], sizes = [8, 16], strides = [1, 1]} : vector<8x64xf32> to vector<8x16xf32>
    %91 = math.tanh %90 : vector<8x16xf32>
    %92 = arith.mulf %88, %76 : vector<8x16xf32>
    %93 = arith.mulf %87, %91 : vector<8x16xf32>
    %94 = arith.addf %92, %93 : vector<8x16xf32>
    %95 = math.tanh %94 : vector<8x16xf32>
    %96 = arith.mulf %89, %95 : vector<8x16xf32>
    %cst_22 = arith.constant dense<0.000000e+00> : vector<8x64xf32>
    %97 = tpu.matmul %96, %36, %cst_22 {dimension_numbers = #tpu.dot_dimension_numbers<[1], [0], [0], [1], [0, 0, 1, 1], [], []>} : vector<8x16xf32>, vector<16x64xf32>, vector<8x64xf32> -> vector<8x64xf32>
    %98 = arith.addf %40, %97 : vector<8x64xf32>
    %99 = vector.extract_strided_slice %98 {offsets = [0, 0], sizes = [8, 48], strides = [1, 1]} : vector<8x64xf32> to vector<8x48xf32>
    %100 = arith.negf %99 : vector<8x48xf32>
    %101 = math.exp %100 : vector<8x48xf32>
    %cst_23 = arith.constant 1.000000e+00 : f32
    %102 = vector.broadcast %cst_23 : f32 to vector<8x48xf32>
    %103 = arith.addf %102, %101 : vector<8x48xf32>
    %104 = arith.divf %102, %103 : vector<8x48xf32>
    %105 = vector.extract_strided_slice %104 {offsets = [0, 0], sizes = [8, 16], strides = [1, 1]} : vector<8x48xf32> to vector<8x16xf32>
    %106 = vector.extract_strided_slice %104 {offsets = [0, 16], sizes = [8, 16], strides = [1, 1]} : vector<8x48xf32> to vector<8x16xf32>
    %107 = vector.extract_strided_slice %104 {offsets = [0, 32], sizes = [8, 16], strides = [1, 1]} : vector<8x48xf32> to vector<8x16xf32>
    %108 = vector.extract_strided_slice %98 {offsets = [0, 48], sizes = [8, 16], strides = [1, 1]} : vector<8x64xf32> to vector<8x16xf32>
    %109 = math.tanh %108 : vector<8x16xf32>
    %110 = arith.mulf %106, %94 : vector<8x16xf32>
    %111 = arith.mulf %105, %109 : vector<8x16xf32>
    %112 = arith.addf %110, %111 : vector<8x16xf32>
    %113 = math.tanh %112 : vector<8x16xf32>
    %114 = arith.mulf %107, %113 : vector<8x16xf32>
    %c0_24 = arith.constant 0 : index
    %c0_25 = arith.constant 0 : index
    %115 = vector.load %arg4[%c0_24, %c0_25] : memref<16x32xf32, #tpu.memory_space<vmem>>, vector<16x32xf32>
    %c0_26 = arith.constant 0 : index
    %c0_27 = arith.constant 0 : index
    %116 = vector.load %arg5[%c0_26, %c0_27] : memref<8x32xf32, #tpu.memory_space<vmem>>, vector<8x32xf32>
    %c0_28 = arith.constant 0 : index
    %c0_29 = arith.constant 0 : index
    %117 = vector.load %arg6[%c0_28, %c0_29] : memref<1x32xf32, #tpu.memory_space<vmem>>, vector<1x32xf32>
    %118 = tpu.concatenate %60, %78, %96, %114 in 0 : vector<8x16xf32>, vector<8x16xf32>, vector<8x16xf32>, vector<8x16xf32> -> vector<32x16xf32>
    %119 = arith.negf %118 : vector<32x16xf32>
    %120 = math.exp %119 : vector<32x16xf32>
    %cst_30 = arith.constant 1.000000e+00 : f32
    %121 = vector.broadcast %cst_30 : f32 to vector<32x16xf32>
    %122 = arith.addf %121, %120 : vector<32x16xf32>
    %123 = arith.divf %121, %122 : vector<32x16xf32>
    %cst_31 = arith.constant dense<0.000000e+00> : vector<32x32xf32>
    %124 = tpu.matmul %123, %115, %cst_31 {dimension_numbers = #tpu.dot_dimension_numbers<[1], [0], [0], [1], [0, 0, 1, 1], [], []>} : vector<32x16xf32>, vector<16x32xf32>, vector<32x32xf32> -> vector<32x32xf32>
    %125 = vector.broadcast %117 : vector<1x32xf32> to vector<32x32xf32>
    %126 = arith.addf %124, %125 : vector<32x32xf32>
    %127 = vector.extract_strided_slice %126 {offsets = [0, 0], sizes = [8, 32], strides = [1, 1]} : vector<32x32xf32> to vector<8x32xf32>
    %128 = vector.extract_strided_slice %126 {offsets = [8, 0], sizes = [8, 32], strides = [1, 1]} : vector<32x32xf32> to vector<8x32xf32>
    %129 = vector.extract_strided_slice %126 {offsets = [16, 0], sizes = [8, 32], strides = [1, 1]} : vector<32x32xf32> to vector<8x32xf32>
    %130 = vector.extract_strided_slice %126 {offsets = [24, 0], sizes = [8, 32], strides = [1, 1]} : vector<32x32xf32> to vector<8x32xf32>
    %cst_32 = arith.constant 0.000000e+00 : f32
    %131 = vector.broadcast %cst_32 : f32 to vector<8x8xf32>
    %cst_33 = arith.constant 0.000000e+00 : f32
    %132 = vector.broadcast %cst_33 : f32 to vector<8x8xf32>
    %cst_34 = arith.constant dense<0.000000e+00> : vector<8x32xf32>
    %133 = tpu.matmul %131, %116, %cst_34 {dimension_numbers = #tpu.dot_dimension_numbers<[1], [0], [0], [1], [0, 0, 1, 1], [], []>} : vector<8x8xf32>, vector<8x32xf32>, vector<8x32xf32> -> vector<8x32xf32>
    %134 = arith.addf %127, %133 : vector<8x32xf32>
    %135 = vector.extract_strided_slice %134 {offsets = [0, 0], sizes = [8, 24], strides = [1, 1]} : vector<8x32xf32> to vector<8x24xf32>
    %136 = arith.negf %135 : vector<8x24xf32>
    %137 = math.exp %136 : vector<8x24xf32>
    %cst_35 = arith.constant 1.000000e+00 : f32
    %138 = vector.broadcast %cst_35 : f32 to vector<8x24xf32>
    %139 = arith.addf %138, %137 : vector<8x24xf32>
    %140 = arith.divf %138, %139 : vector<8x24xf32>
    %141 = vector.extract_strided_slice %140 {offsets = [0, 0], sizes = [8, 8], strides = [1, 1]} : vector<8x24xf32> to vector<8x8xf32>
    %142 = vector.extract_strided_slice %140 {offsets = [0, 8], sizes = [8, 8], strides = [1, 1]} : vector<8x24xf32> to vector<8x8xf32>
    %143 = vector.extract_strided_slice %140 {offsets = [0, 16], sizes = [8, 8], strides = [1, 1]} : vector<8x24xf32> to vector<8x8xf32>
    %144 = vector.extract_strided_slice %134 {offsets = [0, 24], sizes = [8, 8], strides = [1, 1]} : vector<8x32xf32> to vector<8x8xf32>
    %145 = math.tanh %144 : vector<8x8xf32>
    %146 = arith.mulf %142, %132 : vector<8x8xf32>
    %147 = arith.mulf %141, %145 : vector<8x8xf32>
    %148 = arith.addf %146, %147 : vector<8x8xf32>
    %149 = math.tanh %148 : vector<8x8xf32>
    %150 = arith.mulf %143, %149 : vector<8x8xf32>
    %cst_36 = arith.constant dense<0.000000e+00> : vector<8x32xf32>
    %151 = tpu.matmul %150, %116, %cst_36 {dimension_numbers = #tpu.dot_dimension_numbers<[1], [0], [0], [1], [0, 0, 1, 1], [], []>} : vector<8x8xf32>, vector<8x32xf32>, vector<8x32xf32> -> vector<8x32xf32>
    %152 = arith.addf %128, %151 : vector<8x32xf32>
    %153 = vector.extract_strided_slice %152 {offsets = [0, 0], sizes = [8, 24], strides = [1, 1]} : vector<8x32xf32> to vector<8x24xf32>
    %154 = arith.negf %153 : vector<8x24xf32>
    %155 = math.exp %154 : vector<8x24xf32>
    %cst_37 = arith.constant 1.000000e+00 : f32
    %156 = vector.broadcast %cst_37 : f32 to vector<8x24xf32>
    %157 = arith.addf %156, %155 : vector<8x24xf32>
    %158 = arith.divf %156, %157 : vector<8x24xf32>
    %159 = vector.extract_strided_slice %158 {offsets = [0, 0], sizes = [8, 8], strides = [1, 1]} : vector<8x24xf32> to vector<8x8xf32>
    %160 = vector.extract_strided_slice %158 {offsets = [0, 8], sizes = [8, 8], strides = [1, 1]} : vector<8x24xf32> to vector<8x8xf32>
    %161 = vector.extract_strided_slice %158 {offsets = [0, 16], sizes = [8, 8], strides = [1, 1]} : vector<8x24xf32> to vector<8x8xf32>
    %162 = vector.extract_strided_slice %152 {offsets = [0, 24], sizes = [8, 8], strides = [1, 1]} : vector<8x32xf32> to vector<8x8xf32>
    %163 = math.tanh %162 : vector<8x8xf32>
    %164 = arith.mulf %160, %148 : vector<8x8xf32>
    %165 = arith.mulf %159, %163 : vector<8x8xf32>
    %166 = arith.addf %164, %165 : vector<8x8xf32>
    %167 = math.tanh %166 : vector<8x8xf32>
    %168 = arith.mulf %161, %167 : vector<8x8xf32>
    %cst_38 = arith.constant dense<0.000000e+00> : vector<8x32xf32>
    %169 = tpu.matmul %168, %116, %cst_38 {dimension_numbers = #tpu.dot_dimension_numbers<[1], [0], [0], [1], [0, 0, 1, 1], [], []>} : vector<8x8xf32>, vector<8x32xf32>, vector<8x32xf32> -> vector<8x32xf32>
    %170 = arith.addf %129, %169 : vector<8x32xf32>
    %171 = vector.extract_strided_slice %170 {offsets = [0, 0], sizes = [8, 24], strides = [1, 1]} : vector<8x32xf32> to vector<8x24xf32>
    %172 = arith.negf %171 : vector<8x24xf32>
    %173 = math.exp %172 : vector<8x24xf32>
    %cst_39 = arith.constant 1.000000e+00 : f32
    %174 = vector.broadcast %cst_39 : f32 to vector<8x24xf32>
    %175 = arith.addf %174, %173 : vector<8x24xf32>
    %176 = arith.divf %174, %175 : vector<8x24xf32>
    %177 = vector.extract_strided_slice %176 {offsets = [0, 0], sizes = [8, 8], strides = [1, 1]} : vector<8x24xf32> to vector<8x8xf32>
    %178 = vector.extract_strided_slice %176 {offsets = [0, 8], sizes = [8, 8], strides = [1, 1]} : vector<8x24xf32> to vector<8x8xf32>
    %179 = vector.extract_strided_slice %176 {offsets = [0, 16], sizes = [8, 8], strides = [1, 1]} : vector<8x24xf32> to vector<8x8xf32>
    %180 = vector.extract_strided_slice %170 {offsets = [0, 24], sizes = [8, 8], strides = [1, 1]} : vector<8x32xf32> to vector<8x8xf32>
    %181 = math.tanh %180 : vector<8x8xf32>
    %182 = arith.mulf %178, %166 : vector<8x8xf32>
    %183 = arith.mulf %177, %181 : vector<8x8xf32>
    %184 = arith.addf %182, %183 : vector<8x8xf32>
    %185 = math.tanh %184 : vector<8x8xf32>
    %186 = arith.mulf %179, %185 : vector<8x8xf32>
    %cst_40 = arith.constant dense<0.000000e+00> : vector<8x32xf32>
    %187 = tpu.matmul %186, %116, %cst_40 {dimension_numbers = #tpu.dot_dimension_numbers<[1], [0], [0], [1], [0, 0, 1, 1], [], []>} : vector<8x8xf32>, vector<8x32xf32>, vector<8x32xf32> -> vector<8x32xf32>
    %188 = arith.addf %130, %187 : vector<8x32xf32>
    %189 = vector.extract_strided_slice %188 {offsets = [0, 0], sizes = [8, 24], strides = [1, 1]} : vector<8x32xf32> to vector<8x24xf32>
    %190 = arith.negf %189 : vector<8x24xf32>
    %191 = math.exp %190 : vector<8x24xf32>
    %cst_41 = arith.constant 1.000000e+00 : f32
    %192 = vector.broadcast %cst_41 : f32 to vector<8x24xf32>
    %193 = arith.addf %192, %191 : vector<8x24xf32>
    %194 = arith.divf %192, %193 : vector<8x24xf32>
    %195 = vector.extract_strided_slice %194 {offsets = [0, 0], sizes = [8, 8], strides = [1, 1]} : vector<8x24xf32> to vector<8x8xf32>
    %196 = vector.extract_strided_slice %194 {offsets = [0, 8], sizes = [8, 8], strides = [1, 1]} : vector<8x24xf32> to vector<8x8xf32>
    %197 = vector.extract_strided_slice %194 {offsets = [0, 16], sizes = [8, 8], strides = [1, 1]} : vector<8x24xf32> to vector<8x8xf32>
    %198 = vector.extract_strided_slice %188 {offsets = [0, 24], sizes = [8, 8], strides = [1, 1]} : vector<8x32xf32> to vector<8x8xf32>
    %199 = math.tanh %198 : vector<8x8xf32>
    %200 = arith.mulf %196, %184 : vector<8x8xf32>
    %201 = arith.mulf %195, %199 : vector<8x8xf32>
    %202 = arith.addf %200, %201 : vector<8x8xf32>
    %203 = math.tanh %202 : vector<8x8xf32>
    %204 = arith.mulf %197, %203 : vector<8x8xf32>
    %c0_42 = arith.constant 0 : index
    %c0_43 = arith.constant 0 : index
    %205 = vector.load %arg7[%c0_42, %c0_43] : memref<8x32xf32, #tpu.memory_space<vmem>>, vector<8x32xf32>
    %c0_44 = arith.constant 0 : index
    %c0_45 = arith.constant 0 : index
    %206 = vector.load %arg8[%c0_44, %c0_45] : memref<8x32xf32, #tpu.memory_space<vmem>>, vector<8x32xf32>
    %c0_46 = arith.constant 0 : index
    %c0_47 = arith.constant 0 : index
    %207 = vector.load %arg9[%c0_46, %c0_47] : memref<1x32xf32, #tpu.memory_space<vmem>>, vector<1x32xf32>
    %208 = tpu.concatenate %150, %168, %186, %204 in 0 : vector<8x8xf32>, vector<8x8xf32>, vector<8x8xf32>, vector<8x8xf32> -> vector<32x8xf32>
    %209 = arith.negf %208 : vector<32x8xf32>
    %210 = math.exp %209 : vector<32x8xf32>
    %cst_48 = arith.constant 1.000000e+00 : f32
    %211 = vector.broadcast %cst_48 : f32 to vector<32x8xf32>
    %212 = arith.addf %211, %210 : vector<32x8xf32>
    %213 = arith.divf %211, %212 : vector<32x8xf32>
    %cst_49 = arith.constant dense<0.000000e+00> : vector<32x32xf32>
    %214 = tpu.matmul %213, %205, %cst_49 {dimension_numbers = #tpu.dot_dimension_numbers<[1], [0], [0], [1], [0, 0, 1, 1], [], []>} : vector<32x8xf32>, vector<8x32xf32>, vector<32x32xf32> -> vector<32x32xf32>
    %215 = vector.broadcast %207 : vector<1x32xf32> to vector<32x32xf32>
    %216 = arith.addf %214, %215 : vector<32x32xf32>
    %217 = vector.extract_strided_slice %216 {offsets = [0, 0], sizes = [8, 32], strides = [1, 1]} : vector<32x32xf32> to vector<8x32xf32>
    %218 = vector.extract_strided_slice %216 {offsets = [8, 0], sizes = [8, 32], strides = [1, 1]} : vector<32x32xf32> to vector<8x32xf32>
    %219 = vector.extract_strided_slice %216 {offsets = [16, 0], sizes = [8, 32], strides = [1, 1]} : vector<32x32xf32> to vector<8x32xf32>
    %220 = vector.extract_strided_slice %216 {offsets = [24, 0], sizes = [8, 32], strides = [1, 1]} : vector<32x32xf32> to vector<8x32xf32>
    %cst_50 = arith.constant 0.000000e+00 : f32
    %221 = vector.broadcast %cst_50 : f32 to vector<8x8xf32>
    %cst_51 = arith.constant 0.000000e+00 : f32
    %222 = vector.broadcast %cst_51 : f32 to vector<8x8xf32>
    %cst_52 = arith.constant dense<0.000000e+00> : vector<8x32xf32>
    %223 = tpu.matmul %221, %206, %cst_52 {dimension_numbers = #tpu.dot_dimension_numbers<[1], [0], [0], [1], [0, 0, 1, 1], [], []>} : vector<8x8xf32>, vector<8x32xf32>, vector<8x32xf32> -> vector<8x32xf32>
    %224 = arith.addf %217, %223 : vector<8x32xf32>
    %225 = vector.extract_strided_slice %224 {offsets = [0, 0], sizes = [8, 24], strides = [1, 1]} : vector<8x32xf32> to vector<8x24xf32>
    %226 = arith.negf %225 : vector<8x24xf32>
    %227 = math.exp %226 : vector<8x24xf32>
    %cst_53 = arith.constant 1.000000e+00 : f32
    %228 = vector.broadcast %cst_53 : f32 to vector<8x24xf32>
    %229 = arith.addf %228, %227 : vector<8x24xf32>
    %230 = arith.divf %228, %229 : vector<8x24xf32>
    %231 = vector.extract_strided_slice %230 {offsets = [0, 0], sizes = [8, 8], strides = [1, 1]} : vector<8x24xf32> to vector<8x8xf32>
    %232 = vector.extract_strided_slice %230 {offsets = [0, 8], sizes = [8, 8], strides = [1, 1]} : vector<8x24xf32> to vector<8x8xf32>
    %233 = vector.extract_strided_slice %230 {offsets = [0, 16], sizes = [8, 8], strides = [1, 1]} : vector<8x24xf32> to vector<8x8xf32>
    %234 = vector.extract_strided_slice %224 {offsets = [0, 24], sizes = [8, 8], strides = [1, 1]} : vector<8x32xf32> to vector<8x8xf32>
    %235 = math.tanh %234 : vector<8x8xf32>
    %236 = arith.mulf %232, %222 : vector<8x8xf32>
    %237 = arith.mulf %231, %235 : vector<8x8xf32>
    %238 = arith.addf %236, %237 : vector<8x8xf32>
    %239 = math.tanh %238 : vector<8x8xf32>
    %240 = arith.mulf %233, %239 : vector<8x8xf32>
    %cst_54 = arith.constant dense<0.000000e+00> : vector<8x32xf32>
    %241 = tpu.matmul %240, %206, %cst_54 {dimension_numbers = #tpu.dot_dimension_numbers<[1], [0], [0], [1], [0, 0, 1, 1], [], []>} : vector<8x8xf32>, vector<8x32xf32>, vector<8x32xf32> -> vector<8x32xf32>
    %242 = arith.addf %218, %241 : vector<8x32xf32>
    %243 = vector.extract_strided_slice %242 {offsets = [0, 0], sizes = [8, 24], strides = [1, 1]} : vector<8x32xf32> to vector<8x24xf32>
    %244 = arith.negf %243 : vector<8x24xf32>
    %245 = math.exp %244 : vector<8x24xf32>
    %cst_55 = arith.constant 1.000000e+00 : f32
    %246 = vector.broadcast %cst_55 : f32 to vector<8x24xf32>
    %247 = arith.addf %246, %245 : vector<8x24xf32>
    %248 = arith.divf %246, %247 : vector<8x24xf32>
    %249 = vector.extract_strided_slice %248 {offsets = [0, 0], sizes = [8, 8], strides = [1, 1]} : vector<8x24xf32> to vector<8x8xf32>
    %250 = vector.extract_strided_slice %248 {offsets = [0, 8], sizes = [8, 8], strides = [1, 1]} : vector<8x24xf32> to vector<8x8xf32>
    %251 = vector.extract_strided_slice %248 {offsets = [0, 16], sizes = [8, 8], strides = [1, 1]} : vector<8x24xf32> to vector<8x8xf32>
    %252 = vector.extract_strided_slice %242 {offsets = [0, 24], sizes = [8, 8], strides = [1, 1]} : vector<8x32xf32> to vector<8x8xf32>
    %253 = math.tanh %252 : vector<8x8xf32>
    %254 = arith.mulf %250, %238 : vector<8x8xf32>
    %255 = arith.mulf %249, %253 : vector<8x8xf32>
    %256 = arith.addf %254, %255 : vector<8x8xf32>
    %257 = math.tanh %256 : vector<8x8xf32>
    %258 = arith.mulf %251, %257 : vector<8x8xf32>
    %cst_56 = arith.constant dense<0.000000e+00> : vector<8x32xf32>
    %259 = tpu.matmul %258, %206, %cst_56 {dimension_numbers = #tpu.dot_dimension_numbers<[1], [0], [0], [1], [0, 0, 1, 1], [], []>} : vector<8x8xf32>, vector<8x32xf32>, vector<8x32xf32> -> vector<8x32xf32>
    %260 = arith.addf %219, %259 : vector<8x32xf32>
    %261 = vector.extract_strided_slice %260 {offsets = [0, 0], sizes = [8, 24], strides = [1, 1]} : vector<8x32xf32> to vector<8x24xf32>
    %262 = arith.negf %261 : vector<8x24xf32>
    %263 = math.exp %262 : vector<8x24xf32>
    %cst_57 = arith.constant 1.000000e+00 : f32
    %264 = vector.broadcast %cst_57 : f32 to vector<8x24xf32>
    %265 = arith.addf %264, %263 : vector<8x24xf32>
    %266 = arith.divf %264, %265 : vector<8x24xf32>
    %267 = vector.extract_strided_slice %266 {offsets = [0, 0], sizes = [8, 8], strides = [1, 1]} : vector<8x24xf32> to vector<8x8xf32>
    %268 = vector.extract_strided_slice %266 {offsets = [0, 8], sizes = [8, 8], strides = [1, 1]} : vector<8x24xf32> to vector<8x8xf32>
    %269 = vector.extract_strided_slice %266 {offsets = [0, 16], sizes = [8, 8], strides = [1, 1]} : vector<8x24xf32> to vector<8x8xf32>
    %270 = vector.extract_strided_slice %260 {offsets = [0, 24], sizes = [8, 8], strides = [1, 1]} : vector<8x32xf32> to vector<8x8xf32>
    %271 = math.tanh %270 : vector<8x8xf32>
    %272 = arith.mulf %268, %256 : vector<8x8xf32>
    %273 = arith.mulf %267, %271 : vector<8x8xf32>
    %274 = arith.addf %272, %273 : vector<8x8xf32>
    %275 = math.tanh %274 : vector<8x8xf32>
    %276 = arith.mulf %269, %275 : vector<8x8xf32>
    %cst_58 = arith.constant dense<0.000000e+00> : vector<8x32xf32>
    %277 = tpu.matmul %276, %206, %cst_58 {dimension_numbers = #tpu.dot_dimension_numbers<[1], [0], [0], [1], [0, 0, 1, 1], [], []>} : vector<8x8xf32>, vector<8x32xf32>, vector<8x32xf32> -> vector<8x32xf32>
    %278 = arith.addf %220, %277 : vector<8x32xf32>
    %279 = vector.extract_strided_slice %278 {offsets = [0, 0], sizes = [8, 24], strides = [1, 1]} : vector<8x32xf32> to vector<8x24xf32>
    %280 = arith.negf %279 : vector<8x24xf32>
    %281 = math.exp %280 : vector<8x24xf32>
    %cst_59 = arith.constant 1.000000e+00 : f32
    %282 = vector.broadcast %cst_59 : f32 to vector<8x24xf32>
    %283 = arith.addf %282, %281 : vector<8x24xf32>
    %284 = arith.divf %282, %283 : vector<8x24xf32>
    %285 = vector.extract_strided_slice %284 {offsets = [0, 0], sizes = [8, 8], strides = [1, 1]} : vector<8x24xf32> to vector<8x8xf32>
    %286 = vector.extract_strided_slice %284 {offsets = [0, 8], sizes = [8, 8], strides = [1, 1]} : vector<8x24xf32> to vector<8x8xf32>
    %287 = vector.extract_strided_slice %284 {offsets = [0, 16], sizes = [8, 8], strides = [1, 1]} : vector<8x24xf32> to vector<8x8xf32>
    %288 = vector.extract_strided_slice %278 {offsets = [0, 24], sizes = [8, 8], strides = [1, 1]} : vector<8x32xf32> to vector<8x8xf32>
    %289 = math.tanh %288 : vector<8x8xf32>
    %290 = arith.mulf %286, %274 : vector<8x8xf32>
    %291 = arith.mulf %285, %289 : vector<8x8xf32>
    %292 = arith.addf %290, %291 : vector<8x8xf32>
    %293 = math.tanh %292 : vector<8x8xf32>
    %294 = arith.mulf %287, %293 : vector<8x8xf32>
    %295 = tpu.concatenate %240, %258, %276, %294 in 0 : vector<8x8xf32>, vector<8x8xf32>, vector<8x8xf32>, vector<8x8xf32> -> vector<32x8xf32>
    %c0_60 = arith.constant 0 : index
    %c0_61 = arith.constant 0 : index
    %296 = vector.load %arg10[%c0_60, %c0_61] : memref<8x4xf32, #tpu.memory_space<vmem>>, vector<8x4xf32>
    %cst_62 = arith.constant dense<0.000000e+00> : vector<32x4xf32>
    %297 = tpu.matmul %295, %296, %cst_62 {dimension_numbers = #tpu.dot_dimension_numbers<[1], [0], [0], [1], [0, 0, 1, 1], [], []>} : vector<32x8xf32>, vector<8x4xf32>, vector<32x4xf32> -> vector<32x4xf32>
    %c0_63 = arith.constant 0 : index
    %c0_64 = arith.constant 0 : index
    %298 = vector.load %arg11[%c0_63, %c0_64] : memref<32x4xf32, #tpu.memory_space<vmem>>, vector<32x4xf32>
    tpu.vector_store %arg11[%c0_63, %c0_64], %297 {strides = array<i32>} : memref<32x4xf32, #tpu.memory_space<vmem>>, vector<32x4xf32>,
    return
  }
}

</mosaic_0001>

<llo_original>
// kernel: tpu_custom_call.1
$region0: #{tpu_custom_call.1}
  #allocation0 [shape = 'u32[]', space=smem, size = 0x4, offset = 0x4, fixed_abs, tag = 'smem constant byte address 0x4 - core index']
  #allocation1 [shape = 'u32[144,128]{1,0:T(1,128)}', space=vmem, size = 0x12000, scoped, tag = 'internal scratch']
  %s0 = inlined_call_operand.hbm [shape: f32[8,16], index: 0, kind: input, shape index: {}]
  %s1 = inlined_call_operand.hbm [shape: f32[8,64], index: 1, kind: input, shape index: {}]
  %s2 = inlined_call_operand.hbm [shape: f32[16,64], index: 2, kind: input, shape index: {}]
  %s3 = inlined_call_operand.hbm [shape: f32[1,64], index: 3, kind: input, shape index: {}]
  %s4 = inlined_call_operand.vmem [shape: f32[16,32], index: 4, kind: input, shape index: {}]
  %s5 = inlined_call_operand.hbm [shape: f32[8,32], index: 5, kind: input, shape index: {}]
  %s6 = inlined_call_operand.hbm [shape: f32[1,32], index: 6, kind: input, shape index: {}]
  %s7 = inlined_call_operand.vmem [shape: f32[8,32], index: 7, kind: input, shape index: {}]
  %s8 = inlined_call_operand.hbm [shape: f32[8,32], index: 8, kind: input, shape index: {}]
  %s9 = inlined_call_operand.hbm [shape: f32[1,32], index: 9, kind: input, shape index: {}]
  %s10 = inlined_call_operand.vmem [shape: f32[8,4], index: 10, kind: input, shape index: {}]
  %s11 = inlined_call_operand.vmem [shape: f32[32,4], index: 11, kind: output, shape index: {}]
  %s12 = sld [smem:[#allocation0]]
  $region86: #{tpu_custom_call.1} parent=0
    _
  %s14 = ssub.s32 1, %s12
  %s15 = scalar_select 0, %s14, %s12
  $region1: #{tpu_custom_call.1} parent=0
    #allocation2 [shape = 'u8[4096]{0}', space=vmem, size = 0x1000, scoped, tag = 'input window, operand 0, single buffered']
    #allocation3 [shape = 's32[1]{0}', space=sflag, size = 0x4, scoped, tag = 'scoped memory for tpu_custom_call.1']
    #allocation4 [shape = 'u8[4096]{0}', space=vmem, size = 0x1000, scoped, tag = 'input window, operand 1, single buffered']
    #allocation5 [shape = 's32[1]{0}', space=sflag, size = 0x4, scoped, tag = 'scoped memory for tpu_custom_call.1']
    #allocation6 [shape = 'u8[8192]{0}', space=vmem, size = 0x2000, scoped, tag = 'input window, operand 2, single buffered']
    #allocation7 [shape = 'u8[512]{0}', space=vmem, size = 0x400, scoped, tag = 'input window, operand 3, single buffered']
    #allocation8 [shape = 's32[1]{0}', space=sflag, size = 0x4, scoped, tag = 'scoped memory for tpu_custom_call.1']
    #allocation9 [shape = 'u8[4096]{0}', space=vmem, size = 0x1000, scoped, tag = 'input window, operand 5, single buffered']
    #allocation10 [shape = 'u8[512]{0}', space=vmem, size = 0x400, scoped, tag = 'input window, operand 6, single buffered']
    #allocation11 [shape = 's32[1]{0}', space=sflag, size = 0x4, scoped, tag = 'scoped memory for tpu_custom_call.1']
    #allocation12 [shape = 'u8[4096]{0}', space=vmem, size = 0x1000, scoped, tag = 'input window, operand 8, single buffered']
    #allocation13 [shape = 'u8[512]{0}', space=vmem, size = 0x400, scoped, tag = 'input window, operand 9, single buffered']
    #allocation14 [shape = 's32[1]{0}', space=sflag, size = 0x4, scoped, tag = 'scoped memory for tpu_custom_call.1']
    %16 = vsyncpa [#allocation3], 0
    %17 = vsyncpa [#allocation5], 0
    %18 = vsyncpa [#allocation8], 0
    %19 = vsyncpa [#allocation11], 0
    %20 = vsyncpa [#allocation14], 0
    // Predicated region
    $region2: #{tpu_custom_call.1} parent=1 // pred_check
      _
    $region3: #{tpu_custom_call.1} parent=1 // pred_check_branch
      %22 = sbr.rel (0) target = $region5
    $region4: #{tpu_custom_call.1} parent=1 // pred_region
      %s24 = ssub.s32 128, 128
      %25 = vsyncadd [#allocation3], %s24
      %s27 = sshll.u32 [#allocation2], 4
      %s28 = int_to_ptr.vmem [resolvable:$true] %s27
      %30 = dma.hbm_to_vmem [thread:$0]  %s0, 128, %s28, [#allocation3]
    $region5: #{tpu_custom_call.1} parent=1 // pred_fallthru
      _
    // Predicated region
    $region6: #{tpu_custom_call.1} parent=1 // pred_check
      _
    $region7: #{tpu_custom_call.1} parent=1 // pred_check_branch
      %32 = sbr.rel (0) target = $region9
    $region8: #{tpu_custom_call.1} parent=1 // pred_region
      %s34 = ssub.s32 128, 128
      %35 = vsyncadd [#allocation5], %s34
      %s37 = sshll.u32 [#allocation4], 4
      %s38 = int_to_ptr.vmem [resolvable:$true] %s37
      %40 = dma.hbm_to_vmem [thread:$0]  %s1, 128, %s38, [#allocation5]
    $region9: #{tpu_custom_call.1} parent=1 // pred_fallthru
      _
    // Predicated region
    $region10: #{tpu_custom_call.1} parent=1 // pred_check
      _
    $region11: #{tpu_custom_call.1} parent=1 // pred_check_branch
      %42 = sbr.rel (0) target = $region13
    $region12: #{tpu_custom_call.1} parent=1 // pred_region
      %s44 = ssub.s32 256, 256
      %45 = vsyncadd [#allocation5], %s44
      %s46 = sshll.u32 [#allocation6], 4
      %s47 = int_to_ptr.vmem [resolvable:$true] %s46
      %52 = dma.hbm_to_vmem [thread:$0]  %s2, 256, %s47, [#allocation5], 128, 128, 8
    $region13: #{tpu_custom_call.1} parent=1 // pred_fallthru
      _
    // Predicated region
    $region14: #{tpu_custom_call.1} parent=1 // pred_check
      _
    $region15: #{tpu_custom_call.1} parent=1 // pred_check_branch
      %54 = sbr.rel (0) target = $region17
    $region16: #{tpu_custom_call.1} parent=1 // pred_region
      %s56 = ssub.s32 16, 16
      %57 = vsyncadd [#allocation8], %s56
      %s59 = sshll.u32 [#allocation7], 4
      %s60 = int_to_ptr.vmem [resolvable:$true] %s59
      %62 = dma.hbm_to_vmem [thread:$0]  %s3, 16, %s60, [#allocation8]
    $region17: #{tpu_custom_call.1} parent=1 // pred_fallthru
      _
    // Predicated region
    $region18: #{tpu_custom_call.1} parent=1 // pred_check
      _
    $region19: #{tpu_custom_call.1} parent=1 // pred_check_branch
      %64 = sbr.rel (0) target = $region21
    $region20: #{tpu_custom_call.1} parent=1 // pred_region
      _
    $region21: #{tpu_custom_call.1} parent=1 // pred_fallthru
      _
    // Predicated region
    $region22: #{tpu_custom_call.1} parent=1 // pred_check
      _
    $region23: #{tpu_custom_call.1} parent=1 // pred_check_branch
      %66 = sbr.rel (0) target = $region25
    $region24: #{tpu_custom_call.1} parent=1 // pred_region
      %s68 = ssub.s32 128, 128
      %69 = vsyncadd [#allocation8], %s68
      %s71 = sshll.u32 [#allocation9], 4
      %s72 = int_to_ptr.vmem [resolvable:$true] %s71
      %74 = dma.hbm_to_vmem [thread:$0]  %s5, 128, %s72, [#allocation8]
    $region25: #{tpu_custom_call.1} parent=1 // pred_fallthru
      _
    // Predicated region
    $region26: #{tpu_custom_call.1} parent=1 // pred_check
      _
    $region27: #{tpu_custom_call.1} parent=1 // pred_check_branch
      %76 = sbr.rel (0) target = $region29
    $region28: #{tpu_custom_call.1} parent=1 // pred_region
      %s78 = ssub.s32 16, 16
      %79 = vsyncadd [#allocation11], %s78
      %s81 = sshll.u32 [#allocation10], 4
      %s82 = int_to_ptr.vmem [resolvable:$true] %s81
      %84 = dma.hbm_to_vmem [thread:$0]  %s6, 16, %s82, [#allocation11]
    $region29: #{tpu_custom_call.1} parent=1 // pred_fallthru
      _
    // Predicated region
    $region30: #{tpu_custom_call.1} parent=1 // pred_check
      _
    $region31: #{tpu_custom_call.1} parent=1 // pred_check_branch
      %86 = sbr.rel (0) target = $region33
    $region32: #{tpu_custom_call.1} parent=1 // pred_region
      _
    $region33: #{tpu_custom_call.1} parent=1 // pred_fallthru
      _
    // Predicated region
    $region34: #{tpu_custom_call.1} parent=1 // pred_check
      _
    $region35: #{tpu_custom_call.1} parent=1 // pred_check_branch
      %88 = sbr.rel (0) target = $region37
    $region36: #{tpu_custom_call.1} parent=1 // pred_region
      %s90 = ssub.s32 128, 128
      %91 = vsyncadd [#allocation11], %s90
      %s93 = sshll.u32 [#allocation12], 4
      %s94 = int_to_ptr.vmem [resolvable:$true] %s93
      %96 = dma.hbm_to_vmem [thread:$0]  %s8, 128, %s94, [#allocation11]
    $region37: #{tpu_custom_call.1} parent=1 // pred_fallthru
      _
    // Predicated region
    $region38: #{tpu_custom_call.1} parent=1 // pred_check
      _
    $region39: #{tpu_custom_call.1} parent=1 // pred_check_branch
      %98 = sbr.rel (0) target = $region41
    $region40: #{tpu_custom_call.1} parent=1 // pred_region
      %s100 = ssub.s32 16, 16
      %101 = vsyncadd [#allocation14], %s100
      %s103 = sshll.u32 [#allocation13], 4
      %s104 = int_to_ptr.vmem [resolvable:$true] %s103
      %106 = dma.hbm_to_vmem [thread:$0]  %s9, 16, %s104, [#allocation14]
    $region41: #{tpu_custom_call.1} parent=1 // pred_fallthru
      _
    // Predicated region
    $region42: #{tpu_custom_call.1} parent=1 // pred_check
      _
    $region43: #{tpu_custom_call.1} parent=1 // pred_check_branch
      %108 = sbr.rel (0) target = $region45
    $region44: #{tpu_custom_call.1} parent=1 // pred_region
      _
    $region45: #{tpu_custom_call.1} parent=1 // pred_fallthru
      _
    // Predicated region
    $region46: #{tpu_custom_call.1} parent=1 // pred_check
      _
    $region47: #{tpu_custom_call.1} parent=1 // pred_check_branch
      %110 = sbr.rel (0) target = $region49
    $region48: #{tpu_custom_call.1} parent=1 // pred_region
      %111 = dma.done [#allocation3], 128
    $region49: #{tpu_custom_call.1} parent=1 // pred_fallthru
      _
    // Predicated region
    $region50: #{tpu_custom_call.1} parent=1 // pred_check
      _
    $region51: #{tpu_custom_call.1} parent=1 // pred_check_branch
      %113 = sbr.rel (0) target = $region53
    $region52: #{tpu_custom_call.1} parent=1 // pred_region
      %114 = dma.done [#allocation5], 128
    $region53: #{tpu_custom_call.1} parent=1 // pred_fallthru
      _
    // Predicated region
    $region54: #{tpu_custom_call.1} parent=1 // pred_check
      _
    $region55: #{tpu_custom_call.1} parent=1 // pred_check_branch
      %116 = sbr.rel (0) target = $region57
    $region56: #{tpu_custom_call.1} parent=1 // pred_region
      %117 = dma.done [#allocation5], 256
    $region57: #{tpu_custom_call.1} parent=1 // pred_fallthru
      _
    // Predicated region
    $region58: #{tpu_custom_call.1} parent=1 // pred_check
      _
    $region59: #{tpu_custom_call.1} parent=1 // pred_check_branch
      %119 = sbr.rel (0) target = $region61
    $region60: #{tpu_custom_call.1} parent=1 // pred_region
      %120 = dma.done [#allocation8], 16
    $region61: #{tpu_custom_call.1} parent=1 // pred_fallthru
      _
    // Predicated region
    $region62: #{tpu_custom_call.1} parent=1 // pred_check
      _
    $region63: #{tpu_custom_call.1} parent=1 // pred_check_branch
      %122 = sbr.rel (0) target = $region65
    $region64: #{tpu_custom_call.1} parent=1 // pred_region
      %123 = dma.done [#allocation8], 128
    $region65: #{tpu_custom_call.1} parent=1 // pred_fallthru
      _
    // Predicated region
    $region66: #{tpu_custom_call.1} parent=1 // pred_check
      _
    $region67: #{tpu_custom_call.1} parent=1 // pred_check_branch
      %125 = sbr.rel (0) target = $region69
    $region68: #{tpu_custom_call.1} parent=1 // pred_region
      %126 = dma.done [#allocation11], 16
    $region69: #{tpu_custom_call.1} parent=1 // pred_fallthru
      _
    // Predicated region
    $region70: #{tpu_custom_call.1} parent=1 // pred_check
      _
    $region71: #{tpu_custom_call.1} parent=1 // pred_check_branch
      %128 = sbr.rel (0) target = $region73
    $region72: #{tpu_custom_call.1} parent=1 // pred_region
      %129 = dma.done [#allocation11], 128
    $region73: #{tpu_custom_call.1} parent=1 // pred_fallthru
      _
    // Predicated region
    $region74: #{tpu_custom_call.1} parent=1 // pred_check
      _
    $region75: #{tpu_custom_call.1} parent=1 // pred_check_branch
      %131 = sbr.rel (0) target = $region77
    $region76: #{tpu_custom_call.1} parent=1 // pred_region
      %132 = dma.done [#allocation14], 16
    $region77: #{tpu_custom_call.1} parent=1 // pred_fallthru
      _
    %v133 = vld [vmem:[#allocation2] sm:$0xff]
    %v134 = vadd.f32 %v133, 1.0
    %v135 = vlaneseq
    %v136 = vshrl.u32 %v135, 7
    %v137 = vadd.s32 %v136, 8
    %v138 = vlaneseq
    %v139 = vand.u32 %v138, 127
    %vm140 = vcmp.lt.s32.totalorder %v139, 8
    %v141 = vmul.u32 %v139, 2
    %vm142 = vcmp.eq.s32.totalorder %v136, %v141
    %vm143 = vcmp.eq.s32.totalorder %v137, %v141
    %vm144 = vmand %vm140, %vm142
    %vm145 = vmand %vm140, %vm143
    %vm146 = vcmp.ge.s32.totalorder %v139, 8
    %v147 = vsub.s32 %v139, 8
    %v148 = vmul.u32 %v147, 2
    %vm149 = vcmp.eq.s32.totalorder %v136, %v148
    %vm150 = vcmp.eq.s32.totalorder %v137, %v148
    %v151 = vadd.s32 %v148, 1
    %vm152 = vcmp.eq.s32.totalorder %v136, %v151
    %vm153 = vcmp.eq.s32.totalorder %v137, %v151
    %vm154 = vmor %vm149, %vm152
    %vm155 = vmor %vm150, %vm153
    %vm156 = vmand %vm146, %vm154
    %vm157 = vmand %vm146, %vm155
    %vm158 = vmor %vm144, %vm156
    %vm159 = vmor %vm145, %vm157
    %v160 = vsel %vm158, 1, 0
    %v161 = vsel %vm159, 1, 0
    %v162 = vcvt.s32.f32 %v160
    %v163 = vcvt.s32.f32 %v161
    %vm164 = vcmask 130048
    %v166 = vsel %vm164, %v134, 0
    %168 = vmatprep.subr.mxu0 0.0
    %169 = vmatpush1.msra.mxu0 0.0
    %170 = vmatprep.subr.mxu0 0.0
    %171 = vmatpush1.msra.mxu0 0.0
    %172 = vmatprep.subr.mxu0 0.0
    %173 = vmatpush1.msra.mxu0 0.0
    %174 = vmatprep.subr.mxu0 0.0
    %175 = vmatpush1.msra.mxu0 0.0
    %176 = vmatprep.subr.mxu0 0.0
    %177 = vmatpush1.msra.mxu0 0.0
    %178 = vmatprep.subr.mxu0 0.0
    %179 = vmatpush1.msra.mxu0 0.0
    %180 = vmatprep.subr.mxu0 0.0
    %181 = vmatpush1.msra.mxu0 0.0
    %182 = vmatprep.subr.mxu0 0.0
    %183 = vmatpush1.msra.mxu0 0.0
    %184 = vmatprep.subr.mxu0 0.0
    %185 = vmatpush1.msra.mxu0 0.0
    %186 = vmatprep.subr.mxu0 0.0
    %187 = vmatpush1.msra.mxu0 0.0
    %188 = vmatprep.subr.mxu0 0.0
    %189 = vmatpush1.msra.mxu0 0.0
    %190 = vmatprep.subr.mxu0 0.0
    %191 = vmatpush1.msra.mxu0 0.0
    %192 = vmatprep.subr.mxu0 0.0
    %193 = vmatpush1.msra.mxu0 0.0
    %194 = vmatprep.subr.mxu0 0.0
    %195 = vmatpush1.msra.mxu0 0.0
    %196 = vmatprep.subr.mxu0 0.0
    %197 = vmatpush1.msra.mxu0 %v163
    %198 = vmatprep.subr.mxu0 0.0
    %199 = vmatpush1.msra.mxu0 %v162
    %200 = vmatprep.subr.mxu0 0.0
    %201 = vmatpush2.msra.mxu0 0.0
    %202 = vmatprep.subr.mxu0 0.0
    %203 = vmatpush2.msra.mxu0 0.0
    %204 = vmatprep.subr.mxu0 0.0
    %205 = vmatpush2.msra.mxu0 0.0
    %206 = vmatprep.subr.mxu0 0.0
    %207 = vmatpush2.msra.mxu0 0.0
    %208 = vmatprep.subr.mxu0 0.0
    %209 = vmatpush2.msra.mxu0 0.0
    %210 = vmatprep.subr.mxu0 0.0
    %211 = vmatpush2.msra.mxu0 0.0
    %212 = vmatprep.subr.mxu0 0.0
    %213 = vmatpush2.msra.mxu0 0.0
    %214 = vmatprep.subr.mxu0 0.0
    %215 = vmatpush2.msra.mxu0 0.0
    %216 = vmatprep.subr.mxu0 0.0
    %217 = vmatpush2.msra.mxu0 0.0
    %218 = vmatprep.subr.mxu0 0.0
    %219 = vmatpush2.msra.mxu0 0.0
    %220 = vmatprep.subr.mxu0 0.0
    %221 = vmatpush2.msra.mxu0 0.0
    %222 = vmatprep.subr.mxu0 0.0
    %223 = vmatpush2.msra.mxu0 0.0
    %224 = vmatprep.subr.mxu0 0.0
    %225 = vmatpush2.msra.mxu0 0.0
    %226 = vmatprep.subr.mxu0 0.0
    %227 = vmatpush2.msra.mxu0 0.0
    %228 = vmatprep.subr.mxu0 0.0
    %229 = vmatpush2.msra.mxu0 0.0
    %230 = vmatprep.subr.mxu0 0.0
    %231 = vmatpush2.msra.mxu0 0.0
    %232 = vmatprep.mubr.f32.mxu0 0.0
    %233 = vmatmul.mubr.f32.gmra.mxu0 %v166
    %v234 = vpop.f32.mrf.mxu0
    %v235 = vadd.f32 0.0, %v234
    %v236 = vpop.f32.mrf.mxu0
    %237 = vdwg.mxu0
    %v238 = vrcp.pop %v235
    %240 = vrot.lane.b32.xlu0 %v238, 120
    %v241 = vpop.permute.xlu0 %240
    %v243 = vmul.f32 %v235, %v241
    %v244 = vld [vmem:[#allocation4] sm:$0xff]
    %v245 = vld [vmem:[#allocation6] sm:$0xff]
    %v246 = vld [vmem:[#allocation6 + $0x8] sm:$0xff]
    %v247 = vld [vmem:[#allocation7] sm:$0x1]
    %v249 = vlaneseq
    %v250 = vshrl.u32 %v249, 7
    %v251 = vsub.s32 0, %v250
    %v252 = vrot.slane %v247, %v251
    %vm254 = vcmask 64512
    %v256 = vsel %vm254, %v243, 0
    %258 = vmatprep.subr.mxu0 0.0
    %259 = vmatpush1.msra.mxu0 0.0
    %260 = vmatprep.subr.mxu0 0.0
    %261 = vmatpush1.msra.mxu0 0.0
    %262 = vmatprep.subr.mxu0 0.0
    %263 = vmatpush1.msra.mxu0 0.0
    %264 = vmatprep.subr.mxu0 0.0
    %265 = vmatpush1.msra.mxu0 0.0
    %266 = vmatprep.subr.mxu0 0.0
    %267 = vmatpush1.msra.mxu0 0.0
    %268 = vmatprep.subr.mxu0 0.0
    %269 = vmatpush1.msra.mxu0 0.0
    %270 = vmatprep.subr.mxu0 0.0
    %271 = vmatpush1.msra.mxu0 0.0
    %272 = vmatprep.subr.mxu0 0.0
    %273 = vmatpush1.msra.mxu0 0.0
    %274 = vmatprep.subr.mxu0 0.0
    %275 = vmatpush1.msra.mxu0 0.0
    %276 = vmatprep.subr.mxu0 0.0
    %277 = vmatpush1.msra.mxu0 0.0
    %278 = vmatprep.subr.mxu0 0.0
    %279 = vmatpush1.msra.mxu0 0.0
    %280 = vmatprep.subr.mxu0 0.0
    %281 = vmatpush1.msra.mxu0 0.0
    %282 = vmatprep.subr.mxu0 0.0
    %283 = vmatpush1.msra.mxu0 0.0
    %284 = vmatprep.subr.mxu0 0.0
    %285 = vmatpush1.msra.mxu0 0.0
    %286 = vmatprep.subr.mxu0 0.0
    %287 = vmatpush1.msra.mxu0 0.0
    %288 = vmatprep.subr.mxu0 0.0
    %289 = vmatpush1.msra.mxu0 %v244
    %290 = vmatprep.subr.mxu0 0.0
    %291 = vmatpush2.msra.mxu0 0.0
    %292 = vmatprep.subr.mxu0 0.0
    %293 = vmatpush2.msra.mxu0 0.0
    %294 = vmatprep.subr.mxu0 0.0
    %295 = vmatpush2.msra.mxu0 0.0
    %296 = vmatprep.subr.mxu0 0.0
    %297 = vmatpush2.msra.mxu0 0.0
    %298 = vmatprep.subr.mxu0 0.0
    %299 = vmatpush2.msra.mxu0 0.0
    %300 = vmatprep.subr.mxu0 0.0
    %301 = vmatpush2.msra.mxu0 0.0
    %302 = vmatprep.subr.mxu0 0.0
    %303 = vmatpush2.msra.mxu0 0.0
    %304 = vmatprep.subr.mxu0 0.0
    %305 = vmatpush2.msra.mxu0 0.0
    %306 = vmatprep.subr.mxu0 0.0
    %307 = vmatpush2.msra.mxu0 0.0
    %308 = vmatprep.subr.mxu0 0.0
    %309 = vmatpush2.msra.mxu0 0.0
    %310 = vmatprep.subr.mxu0 0.0
    %311 = vmatpush2.msra.mxu0 0.0
    %312 = vmatprep.subr.mxu0 0.0
    %313 = vmatpush2.msra.mxu0 0.0
    %314 = vmatprep.subr.mxu0 0.0
    %315 = vmatpush2.msra.mxu0 0.0
    %316 = vmatprep.subr.mxu0 0.0
    %317 = vmatpush2.msra.mxu0 0.0
    %318 = vmatprep.subr.mxu0 0.0
    %319 = vmatpush2.msra.mxu0 0.0
    %320 = vmatprep.subr.mxu0 0.0
    %321 = vmatpush2.msra.mxu0 0.0
    %322 = vmatprep.mubr.f32.mxu0 0.0
    %323 = vmatmul.mubr.f32.gmra.mxu0 %v256
    %v324 = vpop.f32.mrf.mxu0
    %v325 = vadd.f32 %v252, %v324
    %v326 = vpop.f32.mrf.mxu0
    %327 = vdwg.mxu0
    %v329 = vsel %vm164, 0.0, 0
    %331 = vmatprep.subr.mxu0 0.0
    %332 = vmatpush1.msra.mxu0 0.0
    %333 = vmatprep.subr.mxu0 0.0
    %334 = vmatpush1.msra.mxu0 0.0
    %335 = vmatprep.subr.mxu0 0.0
    %336 = vmatpush1.msra.mxu0 0.0
    %337 = vmatprep.subr.mxu0 0.0
    %338 = vmatpush1.msra.mxu0 0.0
    %339 = vmatprep.subr.mxu0 0.0
    %340 = vmatpush1.msra.mxu0 0.0
    %341 = vmatprep.subr.mxu0 0.0
    %342 = vmatpush1.msra.mxu0 0.0
    %343 = vmatprep.subr.mxu0 0.0
    %344 = vmatpush1.msra.mxu0 0.0
    %345 = vmatprep.subr.mxu0 0.0
    %346 = vmatpush1.msra.mxu0 0.0
    %347 = vmatprep.subr.mxu0 0.0
    %348 = vmatpush1.msra.mxu0 0.0
    %349 = vmatprep.subr.mxu0 0.0
    %350 = vmatpush1.msra.mxu0 0.0
    %351 = vmatprep.subr.mxu0 0.0
    %352 = vmatpush1.msra.mxu0 0.0
    %353 = vmatprep.subr.mxu0 0.0
    %354 = vmatpush1.msra.mxu0 0.0
    %355 = vmatprep.subr.mxu0 0.0
    %356 = vmatpush1.msra.mxu0 0.0
    %357 = vmatprep.subr.mxu0 0.0
    %358 = vmatpush1.msra.mxu0 0.0
    %359 = vmatprep.subr.mxu0 0.0
    %360 = vmatpush1.msra.mxu0 %v246
    %361 = vmatprep.subr.mxu0 0.0
    %362 = vmatpush1.msra.mxu0 %v245
    %363 = vmatprep.subr.mxu0 0.0
    %364 = vmatpush2.msra.mxu0 0.0
    %365 = vmatprep.subr.mxu0 0.0
    %366 = vmatpush2.msra.mxu0 0.0
    %367 = vmatprep.subr.mxu0 0.0
    %368 = vmatpush2.msra.mxu0 0.0
    %369 = vmatprep.subr.mxu0 0.0
    %370 = vmatpush2.msra.mxu0 0.0
    %371 = vmatprep.subr.mxu0 0.0
    %372 = vmatpush2.msra.mxu0 0.0
    %373 = vmatprep.subr.mxu0 0.0
    %374 = vmatpush2.msra.mxu0 0.0
    %375 = vmatprep.subr.mxu0 0.0
    %376 = vmatpush2.msra.mxu0 0.0
    %377 = vmatprep.subr.mxu0 0.0
    %378 = vmatpush2.msra.mxu0 0.0
    %379 = vmatprep.subr.mxu0 0.0
    %380 = vmatpush2.msra.mxu0 0.0
    %381 = vmatprep.subr.mxu0 0.0
    %382 = vmatpush2.msra.mxu0 0.0
    %383 = vmatprep.subr.mxu0 0.0
    %384 = vmatpush2.msra.mxu0 0.0
    %385 = vmatprep.subr.mxu0 0.0
    %386 = vmatpush2.msra.mxu0 0.0
    %387 = vmatprep.subr.mxu0 0.0
    %388 = vmatpush2.msra.mxu0 0.0
    %389 = vmatprep.subr.mxu0 0.0
    %390 = vmatpush2.msra.mxu0 0.0
    %391 = vmatprep.subr.mxu0 0.0
    %392 = vmatpush2.msra.mxu0 0.0
    %393 = vmatprep.subr.mxu0 0.0
    %394 = vmatpush2.msra.mxu0 0.0
    %395 = vmatprep.mubr.f32.mxu0 0.0
    %396 = vmatmul.mubr.f32.gmra.mxu0 %v329
    %v397 = vpop.f32.mrf.mxu0
    %v398 = vadd.f32 0.0, %v397
    %v399 = vpop.f32.mrf.mxu0
    %400 = vdwg.mxu0
    %v401 = vadd.f32 %v325, %v398
    %v402 = vxor.u32 %v401, 2147483648
    %v403 = vmul.f32 %v402, 1.442695
    %v404 = vpow.pop %v403
    %v405 = vadd.f32 %v404, 1.0
    %v406 = vrcp.pop %v405
    %v407 = vmul.f32 1.0, %v406
    %v408 = vtanh.pop %v401
    %v409 = vmul.f32 %v407, 0.0
    %411 = vrot.lane.b32.xlu0 %v408, 80
    %v412 = vpop.permute.xlu0 %411
    %v414 = vmul.f32 %v407, %v412
    %416 = vrot.lane.b32.xlu0 %v414, 16
    %v417 = vpop.permute.xlu0 %416
    %v419 = vadd.f32 %v409, %v417
    %v420 = vtanh.pop %v419
    %422 = vrot.lane.b32.xlu0 %v420, 16
    %v423 = vpop.permute.xlu0 %422
    %v425 = vmul.f32 %v407, %v423
    %427 = vrot.lane.b32.xlu0 %v425, 96
    %v428 = vpop.permute.xlu0 %427
    %v429 = vsel %vm164, %v428, 0
    %431 = vmatprep.subr.mxu0 0.0
    %432 = vmatpush1.msra.mxu0 0.0
    %433 = vmatprep.subr.mxu0 0.0
    %434 = vmatpush1.msra.mxu0 0.0
    %435 = vmatprep.subr.mxu0 0.0
    %436 = vmatpush1.msra.mxu0 0.0
    %437 = vmatprep.subr.mxu0 0.0
    %438 = vmatpush1.msra.mxu0 0.0
    %439 = vmatprep.subr.mxu0 0.0
    %440 = vmatpush1.msra.mxu0 0.0
    %441 = vmatprep.subr.mxu0 0.0
    %442 = vmatpush1.msra.mxu0 0.0
    %443 = vmatprep.subr.mxu0 0.0
    %444 = vmatpush1.msra.mxu0 0.0
    %445 = vmatprep.subr.mxu0 0.0
    %446 = vmatpush1.msra.mxu0 0.0
    %447 = vmatprep.subr.mxu0 0.0
    %448 = vmatpush1.msra.mxu0 0.0
    %449 = vmatprep.subr.mxu0 0.0
    %450 = vmatpush1.msra.mxu0 0.0
    %451 = vmatprep.subr.mxu0 0.0
    %452 = vmatpush1.msra.mxu0 0.0
    %453 = vmatprep.subr.mxu0 0.0
    %454 = vmatpush1.msra.mxu0 0.0
    %455 = vmatprep.subr.mxu0 0.0
    %456 = vmatpush1.msra.mxu0 0.0
    %457 = vmatprep.subr.mxu0 0.0
    %458 = vmatpush1.msra.mxu0 0.0
    %459 = vmatprep.subr.mxu0 0.0
    %460 = vmatpush1.msra.mxu0 %v246
    %461 = vmatprep.subr.mxu0 0.0
    %462 = vmatpush1.msra.mxu0 %v245
    %463 = vmatprep.subr.mxu0 0.0
    %464 = vmatpush2.msra.mxu0 0.0
    %465 = vmatprep.subr.mxu0 0.0
    %466 = vmatpush2.msra.mxu0 0.0
    %467 = vmatprep.subr.mxu0 0.0
    %468 = vmatpush2.msra.mxu0 0.0
    %469 = vmatprep.subr.mxu0 0.0
    %470 = vmatpush2.msra.mxu0 0.0
    %471 = vmatprep.subr.mxu0 0.0
    %472 = vmatpush2.msra.mxu0 0.0
    %473 = vmatprep.subr.mxu0 0.0
    %474 = vmatpush2.msra.mxu0 0.0
    %475 = vmatprep.subr.mxu0 0.0
    %476 = vmatpush2.msra.mxu0 0.0
    %477 = vmatprep.subr.mxu0 0.0
    %478 = vmatpush2.msra.mxu0 0.0
    %479 = vmatprep.subr.mxu0 0.0
    %480 = vmatpush2.msra.mxu0 0.0
    %481 = vmatprep.subr.mxu0 0.0
    %482 = vmatpush2.msra.mxu0 0.0
    %483 = vmatprep.subr.mxu0 0.0
    %484 = vmatpush2.msra.mxu0 0.0
    %485 = vmatprep.subr.mxu0 0.0
    %486 = vmatpush2.msra.mxu0 0.0
    %487 = vmatprep.subr.mxu0 0.0
    %488 = vmatpush2.msra.mxu0 0.0
    %489 = vmatprep.subr.mxu0 0.0
    %490 = vmatpush2.msra.mxu0 0.0
    %491 = vmatprep.subr.mxu0 0.0
    %492 = vmatpush2.msra.mxu0 0.0
    %493 = vmatprep.subr.mxu0 0.0
    %494 = vmatpush2.msra.mxu0 0.0
    %495 = vmatprep.mubr.f32.mxu0 0.0
    %496 = vmatmul.mubr.f32.gmra.mxu0 %v429
    %v497 = vpop.f32.mrf.mxu0
    %v498 = vadd.f32 0.0, %v497
    %v499 = vpop.f32.mrf.mxu0
    %500 = vdwg.mxu0
    %v501 = vadd.f32 %v325, %v498
    %v502 = vxor.u32 %v501, 2147483648
    %v503 = vmul.f32 %v502, 1.442695
    %v504 = vpow.pop %v503
    %v505 = vadd.f32 %v504, 1.0
    %v506 = vrcp.pop %v505
    %v507 = vmul.f32 1.0, %v506
    %v508 = vtanh.pop %v501
    %v509 = vmul.f32 %v507, %v419
    %511 = vrot.lane.b32.xlu0 %v508, 80
    %v512 = vpop.permute.xlu0 %511
    %v514 = vmul.f32 %v507, %v512
    %516 = vrot.lane.b32.xlu0 %v514, 16
    %v517 = vpop.permute.xlu0 %516
    %v519 = vadd.f32 %v509, %v517
    %v520 = vtanh.pop %v519
    %522 = vrot.lane.b32.xlu0 %v520, 16
    %v523 = vpop.permute.xlu0 %522
    %v525 = vmul.f32 %v507, %v523
    %527 = vrot.lane.b32.xlu0 %v525, 96
    %v528 = vpop.permute.xlu0 %527
    %v529 = vsel %vm164, %v528, 0
    %531 = vmatprep.subr.mxu0 0.0
    %532 = vmatpush1.msra.mxu0 0.0
    %533 = vmatprep.subr.mxu0 0.0
    %534 = vmatpush1.msra.mxu0 0.0
    %535 = vmatprep.subr.mxu0 0.0
    %536 = vmatpush1.msra.mxu0 0.0
    %537 = vmatprep.subr.mxu0 0.0
    %538 = vmatpush1.msra.mxu0 0.0
    %539 = vmatprep.subr.mxu0 0.0
    %540 = vmatpush1.msra.mxu0 0.0
    %541 = vmatprep.subr.mxu0 0.0
    %542 = vmatpush1.msra.mxu0 0.0
    %543 = vmatprep.subr.mxu0 0.0
    %544 = vmatpush1.msra.mxu0 0.0
    %545 = vmatprep.subr.mxu0 0.0
    %546 = vmatpush1.msra.mxu0 0.0
    %547 = vmatprep.subr.mxu0 0.0
    %548 = vmatpush1.msra.mxu0 0.0
    %549 = vmatprep.subr.mxu0 0.0
    %550 = vmatpush1.msra.mxu0 0.0
    %551 = vmatprep.subr.mxu0 0.0
    %552 = vmatpush1.msra.mxu0 0.0
    %553 = vmatprep.subr.mxu0 0.0
    %554 = vmatpush1.msra.mxu0 0.0
    %555 = vmatprep.subr.mxu0 0.0
    %556 = vmatpush1.msra.mxu0 0.0
    %557 = vmatprep.subr.mxu0 0.0
    %558 = vmatpush1.msra.mxu0 0.0
    %559 = vmatprep.subr.mxu0 0.0
    %560 = vmatpush1.msra.mxu0 %v246
    %561 = vmatprep.subr.mxu0 0.0
    %562 = vmatpush1.msra.mxu0 %v245
    %563 = vmatprep.subr.mxu0 0.0
    %564 = vmatpush2.msra.mxu0 0.0
    %565 = vmatprep.subr.mxu0 0.0
    %566 = vmatpush2.msra.mxu0 0.0
    %567 = vmatprep.subr.mxu0 0.0
    %568 = vmatpush2.msra.mxu0 0.0
    %569 = vmatprep.subr.mxu0 0.0
    %570 = vmatpush2.msra.mxu0 0.0
    %571 = vmatprep.subr.mxu0 0.0
    %572 = vmatpush2.msra.mxu0 0.0
    %573 = vmatprep.subr.mxu0 0.0
    %574 = vmatpush2.msra.mxu0 0.0
    %575 = vmatprep.subr.mxu0 0.0
    %576 = vmatpush2.msra.mxu0 0.0
    %577 = vmatprep.subr.mxu0 0.0
    %578 = vmatpush2.msra.mxu0 0.0
    %579 = vmatprep.subr.mxu0 0.0
    %580 = vmatpush2.msra.mxu0 0.0
    %581 = vmatprep.subr.mxu0 0.0
    %582 = vmatpush2.msra.mxu0 0.0
    %583 = vmatprep.subr.mxu0 0.0
    %584 = vmatpush2.msra.mxu0 0.0
    %585 = vmatprep.subr.mxu0 0.0
    %586 = vmatpush2.msra.mxu0 0.0
    %587 = vmatprep.subr.mxu0 0.0
    %588 = vmatpush2.msra.mxu0 0.0
    %589 = vmatprep.subr.mxu0 0.0
    %590 = vmatpush2.msra.mxu0 0.0
    %591 = vmatprep.subr.mxu0 0.0
    %592 = vmatpush2.msra.mxu0 0.0
    %593 = vmatprep.subr.mxu0 0.0
    %594 = vmatpush2.msra.mxu0 0.0
    %595 = vmatprep.mubr.f32.mxu0 0.0
    %596 = vmatmul.mubr.f32.gmra.mxu0 %v529
    %v597 = vpop.f32.mrf.mxu0
    %v598 = vadd.f32 0.0, %v597
    %v599 = vpop.f32.mrf.mxu0
    %600 = vdwg.mxu0
    %v601 = vadd.f32 %v325, %v598
    %v602 = vxor.u32 %v601, 2147483648
    %v603 = vmul.f32 %v602, 1.442695
    %v604 = vpow.pop %v603
    %v605 = vadd.f32 %v604, 1.0
    %v606 = vrcp.pop %v605
    %v607 = vmul.f32 1.0, %v606
    %v608 = vtanh.pop %v601
    %v609 = vmul.f32 %v607, %v519
    %611 = vrot.lane.b32.xlu0 %v608, 80
    %v612 = vpop.permute.xlu0 %611
    %v614 = vmul.f32 %v607, %v612
    %616 = vrot.lane.b32.xlu0 %v614, 16
    %v617 = vpop.permute.xlu0 %616
    %v619 = vadd.f32 %v609, %v617
    %v620 = vtanh.pop %v619
    %622 = vrot.lane.b32.xlu0 %v620, 16
    %v623 = vpop.permute.xlu0 %622
    %v625 = vmul.f32 %v607, %v623
    %627 = vrot.lane.b32.xlu0 %v625, 96
    %v628 = vpop.permute.xlu0 %627
    %v629 = vsel %vm164, %v628, 0
    %631 = vmatprep.subr.mxu0 0.0
    %632 = vmatpush1.msra.mxu0 0.0
    %633 = vmatprep.subr.mxu0 0.0
    %634 = vmatpush1.msra.mxu0 0.0
    %635 = vmatprep.subr.mxu0 0.0
    %636 = vmatpush1.msra.mxu0 0.0
    %637 = vmatprep.subr.mxu0 0.0
    %638 = vmatpush1.msra.mxu0 0.0
    %639 = vmatprep.subr.mxu0 0.0
    %640 = vmatpush1.msra.mxu0 0.0
    %641 = vmatprep.subr.mxu0 0.0
    %642 = vmatpush1.msra.mxu0 0.0
    %643 = vmatprep.subr.mxu0 0.0
    %644 = vmatpush1.msra.mxu0 0.0
    %645 = vmatprep.subr.mxu0 0.0
    %646 = vmatpush1.msra.mxu0 0.0
    %647 = vmatprep.subr.mxu0 0.0
    %648 = vmatpush1.msra.mxu0 0.0
    %649 = vmatprep.subr.mxu0 0.0
    %650 = vmatpush1.msra.mxu0 0.0
    %651 = vmatprep.subr.mxu0 0.0
    %652 = vmatpush1.msra.mxu0 0.0
    %653 = vmatprep.subr.mxu0 0.0
    %654 = vmatpush1.msra.mxu0 0.0
    %655 = vmatprep.subr.mxu0 0.0
    %656 = vmatpush1.msra.mxu0 0.0
    %657 = vmatprep.subr.mxu0 0.0
    %658 = vmatpush1.msra.mxu0 0.0
    %659 = vmatprep.subr.mxu0 0.0
    %660 = vmatpush1.msra.mxu0 %v246
    %661 = vmatprep.subr.mxu0 0.0
    %662 = vmatpush1.msra.mxu0 %v245
    %663 = vmatprep.subr.mxu0 0.0
    %664 = vmatpush2.msra.mxu0 0.0
    %665 = vmatprep.subr.mxu0 0.0
    %666 = vmatpush2.msra.mxu0 0.0
    %667 = vmatprep.subr.mxu0 0.0
    %668 = vmatpush2.msra.mxu0 0.0
    %669 = vmatprep.subr.mxu0 0.0
    %670 = vmatpush2.msra.mxu0 0.0
    %671 = vmatprep.subr.mxu0 0.0
    %672 = vmatpush2.msra.mxu0 0.0
    %673 = vmatprep.subr.mxu0 0.0
    %674 = vmatpush2.msra.mxu0 0.0
    %675 = vmatprep.subr.mxu0 0.0
    %676 = vmatpush2.msra.mxu0 0.0
    %677 = vmatprep.subr.mxu0 0.0
    %678 = vmatpush2.msra.mxu0 0.0
    %679 = vmatprep.subr.mxu0 0.0
    %680 = vmatpush2.msra.mxu0 0.0
    %681 = vmatprep.subr.mxu0 0.0
    %682 = vmatpush2.msra.mxu0 0.0
    %683 = vmatprep.subr.mxu0 0.0
    %684 = vmatpush2.msra.mxu0 0.0
    %685 = vmatprep.subr.mxu0 0.0
    %686 = vmatpush2.msra.mxu0 0.0
    %687 = vmatprep.subr.mxu0 0.0
    %688 = vmatpush2.msra.mxu0 0.0
    %689 = vmatprep.subr.mxu0 0.0
    %690 = vmatpush2.msra.mxu0 0.0
    %691 = vmatprep.subr.mxu0 0.0
    %692 = vmatpush2.msra.mxu0 0.0
    %693 = vmatprep.subr.mxu0 0.0
    %694 = vmatpush2.msra.mxu0 0.0
    %695 = vmatprep.mubr.f32.mxu0 0.0
    %696 = vmatmul.mubr.f32.gmra.mxu0 %v629
    %v697 = vpop.f32.mrf.mxu0
    %v698 = vadd.f32 0.0, %v697
    %v699 = vpop.f32.mrf.mxu0
    %700 = vdwg.mxu0
    %v701 = vadd.f32 %v325, %v698
    %v702 = vxor.u32 %v701, 2147483648
    %v703 = vmul.f32 %v702, 1.442695
    %v704 = vpow.pop %v703
    %v705 = vadd.f32 %v704, 1.0
    %v706 = vrcp.pop %v705
    %v707 = vmul.f32 1.0, %v706
    %v708 = vtanh.pop %v701
    %v709 = vmul.f32 %v707, %v619
    %711 = vrot.lane.b32.xlu0 %v708, 80
    %v712 = vpop.permute.xlu0 %711
    %v714 = vmul.f32 %v707, %v712
    %716 = vrot.lane.b32.xlu0 %v714, 16
    %v717 = vpop.permute.xlu0 %716
    %v719 = vadd.f32 %v709, %v717
    %v720 = vtanh.pop %v719
    %722 = vrot.lane.b32.xlu0 %v720, 16
    %v723 = vpop.permute.xlu0 %722
    %v725 = vmul.f32 %v707, %v723
    %v726 = vld [vmem:[%s4] sm:$0xff]
    %v727 = vld [vmem:[%s4 + $0x8] sm:$0xff]
    %v728 = vld [vmem:[#allocation9] sm:$0xff]
    %v729 = vld [vmem:[#allocation10] sm:$0x1]
    %v730 = vxor.u32 %v425, 2147483648
    %v731 = vxor.u32 %v525, 2147483648
    %v732 = vxor.u32 %v625, 2147483648
    %v733 = vxor.u32 %v725, 2147483648
    %v734 = vmul.f32 %v730, 1.442695
    %v735 = vpow.pop %v734
    %v736 = vmul.f32 %v731, 1.442695
    %v737 = vpow.pop %v736
    %v738 = vmul.f32 %v732, 1.442695
    %v739 = vpow.pop %v738
    %v740 = vmul.f32 %v733, 1.442695
    %v741 = vpow.pop %v740
    %v742 = vadd.f32 %v735, 1.0
    %v743 = vadd.f32 %v737, 1.0
    %v744 = vadd.f32 %v739, 1.0
    %v745 = vadd.f32 %v741, 1.0
    %v746 = vrcp.pop %v742
    %v747 = vmul.f32 1.0, %v746
    %v748 = vrcp.pop %v743
    %v749 = vmul.f32 1.0, %v748
    %v750 = vrcp.pop %v744
    %v751 = vmul.f32 1.0, %v750
    %v752 = vrcp.pop %v745
    %v753 = vmul.f32 1.0, %v752
    %v755 = vlaneseq
    %v756 = vshrl.u32 %v755, 7
    %v757 = vsub.s32 0, %v756
    %v758 = vrot.slane %v729, %v757
    %764 = vrot.lane.b32.xlu0 %v747, 96
    %v765 = vpop.permute.xlu0 %764
    %766 = vrot.lane.b32.xlu0 %v749, 96
    %v767 = vpop.permute.xlu0 %766
    %768 = vrot.lane.b32.xlu0 %v751, 96
    %v769 = vpop.permute.xlu0 %768
    %770 = vrot.lane.b32.xlu0 %v753, 96
    %v771 = vpop.permute.xlu0 %770
    %v772 = vsel %vm164, %v765, 0
    %v774 = vsel %vm164, %v767, 0
    %v776 = vsel %vm164, %v769, 0
    %v778 = vsel %vm164, %v771, 0
    %780 = vmatprep.subr.mxu0 0.0
    %781 = vmatpush1.msra.mxu0 0.0
    %782 = vmatprep.subr.mxu0 0.0
    %783 = vmatpush1.msra.mxu0 0.0
    %784 = vmatprep.subr.mxu0 0.0
    %785 = vmatpush1.msra.mxu0 0.0
    %786 = vmatprep.subr.mxu0 0.0
    %787 = vmatpush1.msra.mxu0 0.0
    %788 = vmatprep.subr.mxu0 0.0
    %789 = vmatpush1.msra.mxu0 0.0
    %790 = vmatprep.subr.mxu0 0.0
    %791 = vmatpush1.msra.mxu0 0.0
    %792 = vmatprep.subr.mxu0 0.0
    %793 = vmatpush1.msra.mxu0 0.0
    %794 = vmatprep.subr.mxu0 0.0
    %795 = vmatpush1.msra.mxu0 0.0
    %796 = vmatprep.subr.mxu0 0.0
    %797 = vmatpush1.msra.mxu0 0.0
    %798 = vmatprep.subr.mxu0 0.0
    %799 = vmatpush1.msra.mxu0 0.0
    %800 = vmatprep.subr.mxu0 0.0
    %801 = vmatpush1.msra.mxu0 0.0
    %802 = vmatprep.subr.mxu0 0.0
    %803 = vmatpush1.msra.mxu0 0.0
    %804 = vmatprep.subr.mxu0 0.0
    %805 = vmatpush1.msra.mxu0 0.0
    %806 = vmatprep.subr.mxu0 0.0
    %807 = vmatpush1.msra.mxu0 0.0
    %808 = vmatprep.subr.mxu0 0.0
    %809 = vmatpush1.msra.mxu0 %v727
    %810 = vmatprep.subr.mxu0 0.0
    %811 = vmatpush1.msra.mxu0 %v726
    %812 = vmatprep.subr.mxu0 0.0
    %813 = vmatpush2.msra.mxu0 0.0
    %814 = vmatprep.subr.mxu0 0.0
    %815 = vmatpush2.msra.mxu0 0.0
    %816 = vmatprep.subr.mxu0 0.0
    %817 = vmatpush2.msra.mxu0 0.0
    %818 = vmatprep.subr.mxu0 0.0
    %819 = vmatpush2.msra.mxu0 0.0
    %820 = vmatprep.subr.mxu0 0.0
    %821 = vmatpush2.msra.mxu0 0.0
    %822 = vmatprep.subr.mxu0 0.0
    %823 = vmatpush2.msra.mxu0 0.0
    %824 = vmatprep.subr.mxu0 0.0
    %825 = vmatpush2.msra.mxu0 0.0
    %826 = vmatprep.subr.mxu0 0.0
    %827 = vmatpush2.msra.mxu0 0.0
    %828 = vmatprep.subr.mxu0 0.0
    %829 = vmatpush2.msra.mxu0 0.0
    %830 = vmatprep.subr.mxu0 0.0
    %831 = vmatpush2.msra.mxu0 0.0
    %832 = vmatprep.subr.mxu0 0.0
    %833 = vmatpush2.msra.mxu0 0.0
    %834 = vmatprep.subr.mxu0 0.0
    %835 = vmatpush2.msra.mxu0 0.0
    %836 = vmatprep.subr.mxu0 0.0
    %837 = vmatpush2.msra.mxu0 0.0
    %838 = vmatprep.subr.mxu0 0.0
    %839 = vmatpush2.msra.mxu0 0.0
    %840 = vmatprep.subr.mxu0 0.0
    %841 = vmatpush2.msra.mxu0 0.0
    %842 = vmatprep.subr.mxu0 0.0
    %843 = vmatpush2.msra.mxu0 0.0
    %844 = vmatprep.mubr.f32.mxu0 0.0
    %845 = vmatmul.mubr.f32.gmra.mxu0 %v772
    %v846 = vpop.f32.mrf.mxu0
    %v847 = vadd.f32 %v758, %v846
    %v848 = vpop.f32.mrf.mxu0
    %849 = vmatprep.mubr.f32.mxu0 0.0
    %850 = vmatmul.mubr.f32.gmra.mxu0 %v774
    %v851 = vpop.f32.mrf.mxu0
    %v852 = vadd.f32 %v758, %v851
    %v853 = vpop.f32.mrf.mxu0
    %854 = vmatprep.mubr.f32.mxu0 0.0
    %855 = vmatmul.mubr.f32.gmra.mxu0 %v776
    %v856 = vpop.f32.mrf.mxu0
    %v857 = vadd.f32 %v758, %v856
    %v858 = vpop.f32.mrf.mxu0
    %859 = vmatprep.mubr.f32.mxu0 0.0
    %860 = vmatmul.mubr.f32.gmra.mxu0 %v778
    %v861 = vpop.f32.mrf.mxu0
    %v862 = vadd.f32 %v758, %v861
    %v863 = vpop.f32.mrf.mxu0
    %864 = vdwg.mxu0
    %v865 = vsel %vm254, 0.0, 0
    %867 = vmatprep.subr.mxu0 0.0
    %868 = vmatpush1.msra.mxu0 0.0
    %869 = vmatprep.subr.mxu0 0.0
    %870 = vmatpush1.msra.mxu0 0.0
    %871 = vmatprep.subr.mxu0 0.0
    %872 = vmatpush1.msra.mxu0 0.0
    %873 = vmatprep.subr.mxu0 0.0
    %874 = vmatpush1.msra.mxu0 0.0
    %875 = vmatprep.subr.mxu0 0.0
    %876 = vmatpush1.msra.mxu0 0.0
    %877 = vmatprep.subr.mxu0 0.0
    %878 = vmatpush1.msra.mxu0 0.0
    %879 = vmatprep.subr.mxu0 0.0
    %880 = vmatpush1.msra.mxu0 0.0
    %881 = vmatprep.subr.mxu0 0.0
    %882 = vmatpush1.msra.mxu0 0.0
    %883 = vmatprep.subr.mxu0 0.0
    %884 = vmatpush1.msra.mxu0 0.0
    %885 = vmatprep.subr.mxu0 0.0
    %886 = vmatpush1.msra.mxu0 0.0
    %887 = vmatprep.subr.mxu0 0.0
    %888 = vmatpush1.msra.mxu0 0.0
    %889 = vmatprep.subr.mxu0 0.0
    %890 = vmatpush1.msra.mxu0 0.0
    %891 = vmatprep.subr.mxu0 0.0
    %892 = vmatpush1.msra.mxu0 0.0
    %893 = vmatprep.subr.mxu0 0.0
    %894 = vmatpush1.msra.mxu0 0.0
    %895 = vmatprep.subr.mxu0 0.0
    %896 = vmatpush1.msra.mxu0 0.0
    %897 = vmatprep.subr.mxu0 0.0
    %898 = vmatpush1.msra.mxu0 %v728
    %899 = vmatprep.subr.mxu0 0.0
    %900 = vmatpush2.msra.mxu0 0.0
    %901 = vmatprep.subr.mxu0 0.0
    %902 = vmatpush2.msra.mxu0 0.0
    %903 = vmatprep.subr.mxu0 0.0
    %904 = vmatpush2.msra.mxu0 0.0
    %905 = vmatprep.subr.mxu0 0.0
    %906 = vmatpush2.msra.mxu0 0.0
    %907 = vmatprep.subr.mxu0 0.0
    %908 = vmatpush2.msra.mxu0 0.0
    %909 = vmatprep.subr.mxu0 0.0
    %910 = vmatpush2.msra.mxu0 0.0
    %911 = vmatprep.subr.mxu0 0.0
    %912 = vmatpush2.msra.mxu0 0.0
    %913 = vmatprep.subr.mxu0 0.0
    %914 = vmatpush2.msra.mxu0 0.0
    %915 = vmatprep.subr.mxu0 0.0
    %916 = vmatpush2.msra.mxu0 0.0
    %917 = vmatprep.subr.mxu0 0.0
    %918 = vmatpush2.msra.mxu0 0.0
    %919 = vmatprep.subr.mxu0 0.0
    %920 = vmatpush2.msra.mxu0 0.0
    %921 = vmatprep.subr.mxu0 0.0
    %922 = vmatpush2.msra.mxu0 0.0
    %923 = vmatprep.subr.mxu0 0.0
    %924 = vmatpush2.msra.mxu0 0.0
    %925 = vmatprep.subr.mxu0 0.0
    %926 = vmatpush2.msra.mxu0 0.0
    %927 = vmatprep.subr.mxu0 0.0
    %928 = vmatpush2.msra.mxu0 0.0
    %929 = vmatprep.subr.mxu0 0.0
    %930 = vmatpush2.msra.mxu0 0.0
    %931 = vmatprep.mubr.f32.mxu0 0.0
    %932 = vmatmul.mubr.f32.gmra.mxu0 %v865
    %v933 = vpop.f32.mrf.mxu0
    %v934 = vadd.f32 0.0, %v933
    %v935 = vpop.f32.mrf.mxu0
    %936 = vdwg.mxu0
    %v937 = vadd.f32 %v847, %v934
    %v938 = vxor.u32 %v937, 2147483648
    %v939 = vmul.f32 %v938, 1.442695
    %v940 = vpow.pop %v939
    %v941 = vadd.f32 %v940, 1.0
    %v942 = vrcp.pop %v941
    %v943 = vmul.f32 1.0, %v942
    %v944 = vtanh.pop %v937
    %v945 = vmul.f32 %v943, 0.0
    %947 = vrot.lane.b32.xlu0 %v944, 104
    %v948 = vpop.permute.xlu0 %947
    %v950 = vmul.f32 %v943, %v948
    %952 = vrot.lane.b32.xlu0 %v950, 8
    %v953 = vpop.permute.xlu0 %952
    %v955 = vadd.f32 %v945, %v953
    %v956 = vtanh.pop %v955
    %958 = vrot.lane.b32.xlu0 %v956, 8
    %v959 = vpop.permute.xlu0 %958
    %v961 = vmul.f32 %v943, %v959
    %963 = vrot.lane.b32.xlu0 %v961, 112
    %v964 = vpop.permute.xlu0 %963
    %v965 = vsel %vm254, %v964, 0
    %967 = vmatprep.subr.mxu0 0.0
    %968 = vmatpush1.msra.mxu0 0.0
    %969 = vmatprep.subr.mxu0 0.0
    %970 = vmatpush1.msra.mxu0 0.0
    %971 = vmatprep.subr.mxu0 0.0
    %972 = vmatpush1.msra.mxu0 0.0
    %973 = vmatprep.subr.mxu0 0.0
    %974 = vmatpush1.msra.mxu0 0.0
    %975 = vmatprep.subr.mxu0 0.0
    %976 = vmatpush1.msra.mxu0 0.0
    %977 = vmatprep.subr.mxu0 0.0
    %978 = vmatpush1.msra.mxu0 0.0
    %979 = vmatprep.subr.mxu0 0.0
    %980 = vmatpush1.msra.mxu0 0.0
    %981 = vmatprep.subr.mxu0 0.0
    %982 = vmatpush1.msra.mxu0 0.0
    %983 = vmatprep.subr.mxu0 0.0
    %984 = vmatpush1.msra.mxu0 0.0
    %985 = vmatprep.subr.mxu0 0.0
    %986 = vmatpush1.msra.mxu0 0.0
    %987 = vmatprep.subr.mxu0 0.0
    %988 = vmatpush1.msra.mxu0 0.0
    %989 = vmatprep.subr.mxu0 0.0
    %990 = vmatpush1.msra.mxu0 0.0
    %991 = vmatprep.subr.mxu0 0.0
    %992 = vmatpush1.msra.mxu0 0.0
    %993 = vmatprep.subr.mxu0 0.0
    %994 = vmatpush1.msra.mxu0 0.0
    %995 = vmatprep.subr.mxu0 0.0
    %996 = vmatpush1.msra.mxu0 0.0
    %997 = vmatprep.subr.mxu0 0.0
    %998 = vmatpush1.msra.mxu0 %v728
    %999 = vmatprep.subr.mxu0 0.0
    %1000 = vmatpush2.msra.mxu0 0.0
    %1001 = vmatprep.subr.mxu0 0.0
    %1002 = vmatpush2.msra.mxu0 0.0
    %1003 = vmatprep.subr.mxu0 0.0
    %1004 = vmatpush2.msra.mxu0 0.0
    %1005 = vmatprep.subr.mxu0 0.0
    %1006 = vmatpush2.msra.mxu0 0.0
    %1007 = vmatprep.subr.mxu0 0.0
    %1008 = vmatpush2.msra.mxu0 0.0
    %1009 = vmatprep.subr.mxu0 0.0
    %1010 = vmatpush2.msra.mxu0 0.0
    %1011 = vmatprep.subr.mxu0 0.0
    %1012 = vmatpush2.msra.mxu0 0.0
    %1013 = vmatprep.subr.mxu0 0.0
    %1014 = vmatpush2.msra.mxu0 0.0
    %1015 = vmatprep.subr.mxu0 0.0
    %1016 = vmatpush2.msra.mxu0 0.0
    %1017 = vmatprep.subr.mxu0 0.0
    %1018 = vmatpush2.msra.mxu0 0.0
    %1019 = vmatprep.subr.mxu0 0.0
    %1020 = vmatpush2.msra.mxu0 0.0
    %1021 = vmatprep.subr.mxu0 0.0
    %1022 = vmatpush2.msra.mxu0 0.0
    %1023 = vmatprep.subr.mxu0 0.0
    %1024 = vmatpush2.msra.mxu0 0.0
    %1025 = vmatprep.subr.mxu0 0.0
    %1026 = vmatpush2.msra.mxu0 0.0
    %1027 = vmatprep.subr.mxu0 0.0
    %1028 = vmatpush2.msra.mxu0 0.0
    %1029 = vmatprep.subr.mxu0 0.0
    %1030 = vmatpush2.msra.mxu0 0.0
    %1031 = vmatprep.mubr.f32.mxu0 0.0
    %1032 = vmatmul.mubr.f32.gmra.mxu0 %v965
    %v1033 = vpop.f32.mrf.mxu0
    %v1034 = vadd.f32 0.0, %v1033
    %v1035 = vpop.f32.mrf.mxu0
    %1036 = vdwg.mxu0
    %v1037 = vadd.f32 %v852, %v1034
    %v1038 = vxor.u32 %v1037, 2147483648
    %v1039 = vmul.f32 %v1038, 1.442695
    %v1040 = vpow.pop %v1039
    %v1041 = vadd.f32 %v1040, 1.0
    %v1042 = vrcp.pop %v1041
    %v1043 = vmul.f32 1.0, %v1042
    %v1044 = vtanh.pop %v1037
    %v1045 = vmul.f32 %v1043, %v955
    %1047 = vrot.lane.b32.xlu0 %v1044, 104
    %v1048 = vpop.permute.xlu0 %1047
    %v1050 = vmul.f32 %v1043, %v1048
    %1052 = vrot.lane.b32.xlu0 %v1050, 8
    %v1053 = vpop.permute.xlu0 %1052
    %v1055 = vadd.f32 %v1045, %v1053
    %v1056 = vtanh.pop %v1055
    %1058 = vrot.lane.b32.xlu0 %v1056, 8
    %v1059 = vpop.permute.xlu0 %1058
    %v1061 = vmul.f32 %v1043, %v1059
    %1063 = vrot.lane.b32.xlu0 %v1061, 112
    %v1064 = vpop.permute.xlu0 %1063
    %v1065 = vsel %vm254, %v1064, 0
    %1067 = vmatprep.subr.mxu0 0.0
    %1068 = vmatpush1.msra.mxu0 0.0
    %1069 = vmatprep.subr.mxu0 0.0
    %1070 = vmatpush1.msra.mxu0 0.0
    %1071 = vmatprep.subr.mxu0 0.0
    %1072 = vmatpush1.msra.mxu0 0.0
    %1073 = vmatprep.subr.mxu0 0.0
    %1074 = vmatpush1.msra.mxu0 0.0
    %1075 = vmatprep.subr.mxu0 0.0
    %1076 = vmatpush1.msra.mxu0 0.0
    %1077 = vmatprep.subr.mxu0 0.0
    %1078 = vmatpush1.msra.mxu0 0.0
    %1079 = vmatprep.subr.mxu0 0.0
    %1080 = vmatpush1.msra.mxu0 0.0
    %1081 = vmatprep.subr.mxu0 0.0
    %1082 = vmatpush1.msra.mxu0 0.0
    %1083 = vmatprep.subr.mxu0 0.0
    %1084 = vmatpush1.msra.mxu0 0.0
    %1085 = vmatprep.subr.mxu0 0.0
    %1086 = vmatpush1.msra.mxu0 0.0
    %1087 = vmatprep.subr.mxu0 0.0
    %1088 = vmatpush1.msra.mxu0 0.0
    %1089 = vmatprep.subr.mxu0 0.0
    %1090 = vmatpush1.msra.mxu0 0.0
    %1091 = vmatprep.subr.mxu0 0.0
    %1092 = vmatpush1.msra.mxu0 0.0
    %1093 = vmatprep.subr.mxu0 0.0
    %1094 = vmatpush1.msra.mxu0 0.0
    %1095 = vmatprep.subr.mxu0 0.0
    %1096 = vmatpush1.msra.mxu0 0.0
    %1097 = vmatprep.subr.mxu0 0.0
    %1098 = vmatpush1.msra.mxu0 %v728
    %1099 = vmatprep.subr.mxu0 0.0
    %1100 = vmatpush2.msra.mxu0 0.0
    %1101 = vmatprep.subr.mxu0 0.0
    %1102 = vmatpush2.msra.mxu0 0.0
    %1103 = vmatprep.subr.mxu0 0.0
    %1104 = vmatpush2.msra.mxu0 0.0
    %1105 = vmatprep.subr.mxu0 0.0
    %1106 = vmatpush2.msra.mxu0 0.0
    %1107 = vmatprep.subr.mxu0 0.0
    %1108 = vmatpush2.msra.mxu0 0.0
    %1109 = vmatprep.subr.mxu0 0.0
    %1110 = vmatpush2.msra.mxu0 0.0
    %1111 = vmatprep.subr.mxu0 0.0
    %1112 = vmatpush2.msra.mxu0 0.0
    %1113 = vmatprep.subr.mxu0 0.0
    %1114 = vmatpush2.msra.mxu0 0.0
    %1115 = vmatprep.subr.mxu0 0.0
    %1116 = vmatpush2.msra.mxu0 0.0
    %1117 = vmatprep.subr.mxu0 0.0
    %1118 = vmatpush2.msra.mxu0 0.0
    %1119 = vmatprep.subr.mxu0 0.0
    %1120 = vmatpush2.msra.mxu0 0.0
    %1121 = vmatprep.subr.mxu0 0.0
    %1122 = vmatpush2.msra.mxu0 0.0
    %1123 = vmatprep.subr.mxu0 0.0
    %1124 = vmatpush2.msra.mxu0 0.0
    %1125 = vmatprep.subr.mxu0 0.0
    %1126 = vmatpush2.msra.mxu0 0.0
    %1127 = vmatprep.subr.mxu0 0.0
    %1128 = vmatpush2.msra.mxu0 0.0
    %1129 = vmatprep.subr.mxu0 0.0
    %1130 = vmatpush2.msra.mxu0 0.0
    %1131 = vmatprep.mubr.f32.mxu0 0.0
    %1132 = vmatmul.mubr.f32.gmra.mxu0 %v1065
    %v1133 = vpop.f32.mrf.mxu0
    %v1134 = vadd.f32 0.0, %v1133
    %v1135 = vpop.f32.mrf.mxu0
    %1136 = vdwg.mxu0
    %v1137 = vadd.f32 %v857, %v1134
    %v1138 = vxor.u32 %v1137, 2147483648
    %v1139 = vmul.f32 %v1138, 1.442695
    %v1140 = vpow.pop %v1139
    %v1141 = vadd.f32 %v1140, 1.0
    %v1142 = vrcp.pop %v1141
    %v1143 = vmul.f32 1.0, %v1142
    %v1144 = vtanh.pop %v1137
    %v1145 = vmul.f32 %v1143, %v1055
    %1147 = vrot.lane.b32.xlu0 %v1144, 104
    %v1148 = vpop.permute.xlu0 %1147
    %v1150 = vmul.f32 %v1143, %v1148
    %1152 = vrot.lane.b32.xlu0 %v1150, 8
    %v1153 = vpop.permute.xlu0 %1152
    %v1155 = vadd.f32 %v1145, %v1153
    %v1156 = vtanh.pop %v1155
    %1158 = vrot.lane.b32.xlu0 %v1156, 8
    %v1159 = vpop.permute.xlu0 %1158
    %v1161 = vmul.f32 %v1143, %v1159
    %1163 = vrot.lane.b32.xlu0 %v1161, 112
    %v1164 = vpop.permute.xlu0 %1163
    %v1165 = vsel %vm254, %v1164, 0
    %1167 = vmatprep.subr.mxu0 0.0
    %1168 = vmatpush1.msra.mxu0 0.0
    %1169 = vmatprep.subr.mxu0 0.0
    %1170 = vmatpush1.msra.mxu0 0.0
    %1171 = vmatprep.subr.mxu0 0.0
    %1172 = vmatpush1.msra.mxu0 0.0
    %1173 = vmatprep.subr.mxu0 0.0
    %1174 = vmatpush1.msra.mxu0 0.0
    %1175 = vmatprep.subr.mxu0 0.0
    %1176 = vmatpush1.msra.mxu0 0.0
    %1177 = vmatprep.subr.mxu0 0.0
    %1178 = vmatpush1.msra.mxu0 0.0
    %1179 = vmatprep.subr.mxu0 0.0
    %1180 = vmatpush1.msra.mxu0 0.0
    %1181 = vmatprep.subr.mxu0 0.0
    %1182 = vmatpush1.msra.mxu0 0.0
    %1183 = vmatprep.subr.mxu0 0.0
    %1184 = vmatpush1.msra.mxu0 0.0
    %1185 = vmatprep.subr.mxu0 0.0
    %1186 = vmatpush1.msra.mxu0 0.0
    %1187 = vmatprep.subr.mxu0 0.0
    %1188 = vmatpush1.msra.mxu0 0.0
    %1189 = vmatprep.subr.mxu0 0.0
    %1190 = vmatpush1.msra.mxu0 0.0
    %1191 = vmatprep.subr.mxu0 0.0
    %1192 = vmatpush1.msra.mxu0 0.0
    %1193 = vmatprep.subr.mxu0 0.0
    %1194 = vmatpush1.msra.mxu0 0.0
    %1195 = vmatprep.subr.mxu0 0.0
    %1196 = vmatpush1.msra.mxu0 0.0
    %1197 = vmatprep.subr.mxu0 0.0
    %1198 = vmatpush1.msra.mxu0 %v728
    %1199 = vmatprep.subr.mxu0 0.0
    %1200 = vmatpush2.msra.mxu0 0.0
    %1201 = vmatprep.subr.mxu0 0.0
    %1202 = vmatpush2.msra.mxu0 0.0
    %1203 = vmatprep.subr.mxu0 0.0
    %1204 = vmatpush2.msra.mxu0 0.0
    %1205 = vmatprep.subr.mxu0 0.0
    %1206 = vmatpush2.msra.mxu0 0.0
    %1207 = vmatprep.subr.mxu0 0.0
    %1208 = vmatpush2.msra.mxu0 0.0
    %1209 = vmatprep.subr.mxu0 0.0
    %1210 = vmatpush2.msra.mxu0 0.0
    %1211 = vmatprep.subr.mxu0 0.0
    %1212 = vmatpush2.msra.mxu0 0.0
    %1213 = vmatprep.subr.mxu0 0.0
    %1214 = vmatpush2.msra.mxu0 0.0
    %1215 = vmatprep.subr.mxu0 0.0
    %1216 = vmatpush2.msra.mxu0 0.0
    %1217 = vmatprep.subr.mxu0 0.0
    %1218 = vmatpush2.msra.mxu0 0.0
    %1219 = vmatprep.subr.mxu0 0.0
    %1220 = vmatpush2.msra.mxu0 0.0
    %1221 = vmatprep.subr.mxu0 0.0
    %1222 = vmatpush2.msra.mxu0 0.0
    %1223 = vmatprep.subr.mxu0 0.0
    %1224 = vmatpush2.msra.mxu0 0.0
    %1225 = vmatprep.subr.mxu0 0.0
    %1226 = vmatpush2.msra.mxu0 0.0
    %1227 = vmatprep.subr.mxu0 0.0
    %1228 = vmatpush2.msra.mxu0 0.0
    %1229 = vmatprep.subr.mxu0 0.0
    %1230 = vmatpush2.msra.mxu0 0.0
    %1231 = vmatprep.mubr.f32.mxu0 0.0
    %1232 = vmatmul.mubr.f32.gmra.mxu0 %v1165
    %v1233 = vpop.f32.mrf.mxu0
    %v1234 = vadd.f32 0.0, %v1233
    %v1235 = vpop.f32.mrf.mxu0
    %1236 = vdwg.mxu0
    %v1237 = vadd.f32 %v862, %v1234
    %v1238 = vxor.u32 %v1237, 2147483648
    %v1239 = vmul.f32 %v1238, 1.442695
    %v1240 = vpow.pop %v1239
    %v1241 = vadd.f32 %v1240, 1.0
    %v1242 = vrcp.pop %v1241
    %v1243 = vmul.f32 1.0, %v1242
    %v1244 = vtanh.pop %v1237
    %v1245 = vmul.f32 %v1243, %v1155
    %1247 = vrot.lane.b32.xlu0 %v1244, 104
    %v1248 = vpop.permute.xlu0 %1247
    %v1250 = vmul.f32 %v1243, %v1248
    %1252 = vrot.lane.b32.xlu0 %v1250, 8
    %v1253 = vpop.permute.xlu0 %1252
    %v1255 = vadd.f32 %v1245, %v1253
    %v1256 = vtanh.pop %v1255
    %1258 = vrot.lane.b32.xlu0 %v1256, 8
    %v1259 = vpop.permute.xlu0 %1258
    %v1261 = vmul.f32 %v1243, %v1259
    %v1262 = vld [vmem:[%s7] sm:$0xff]
    %v1263 = vld [vmem:[#allocation12] sm:$0xff]
    %v1264 = vld [vmem:[#allocation13] sm:$0x1]
    %v1265 = vxor.u32 %v961, 2147483648
    %v1266 = vxor.u32 %v1061, 2147483648
    %v1267 = vxor.u32 %v1161, 2147483648
    %v1268 = vxor.u32 %v1261, 2147483648
    %v1269 = vmul.f32 %v1265, 1.442695
    %v1270 = vpow.pop %v1269
    %v1271 = vmul.f32 %v1266, 1.442695
    %v1272 = vpow.pop %v1271
    %v1273 = vmul.f32 %v1267, 1.442695
    %v1274 = vpow.pop %v1273
    %v1275 = vmul.f32 %v1268, 1.442695
    %v1276 = vpow.pop %v1275
    %v1277 = vadd.f32 %v1270, 1.0
    %v1278 = vadd.f32 %v1272, 1.0
    %v1279 = vadd.f32 %v1274, 1.0
    %v1280 = vadd.f32 %v1276, 1.0
    %v1281 = vrcp.pop %v1277
    %v1282 = vmul.f32 1.0, %v1281
    %v1283 = vrcp.pop %v1278
    %v1284 = vmul.f32 1.0, %v1283
    %v1285 = vrcp.pop %v1279
    %v1286 = vmul.f32 1.0, %v1285
    %v1287 = vrcp.pop %v1280
    %v1288 = vmul.f32 1.0, %v1287
    %v1290 = vlaneseq
    %v1291 = vshrl.u32 %v1290, 7
    %v1292 = vsub.s32 0, %v1291
    %v1293 = vrot.slane %v1264, %v1292
    %1299 = vrot.lane.b32.xlu0 %v1282, 112
    %v1300 = vpop.permute.xlu0 %1299
    %1301 = vrot.lane.b32.xlu0 %v1284, 112
    %v1302 = vpop.permute.xlu0 %1301
    %1303 = vrot.lane.b32.xlu0 %v1286, 112
    %v1304 = vpop.permute.xlu0 %1303
    %1305 = vrot.lane.b32.xlu0 %v1288, 112
    %v1306 = vpop.permute.xlu0 %1305
    %v1307 = vsel %vm254, %v1300, 0
    %v1309 = vsel %vm254, %v1302, 0
    %v1311 = vsel %vm254, %v1304, 0
    %v1313 = vsel %vm254, %v1306, 0
    %1315 = vmatprep.subr.mxu0 0.0
    %1316 = vmatpush1.msra.mxu0 0.0
    %1317 = vmatprep.subr.mxu0 0.0
    %1318 = vmatpush1.msra.mxu0 0.0
    %1319 = vmatprep.subr.mxu0 0.0
    %1320 = vmatpush1.msra.mxu0 0.0
    %1321 = vmatprep.subr.mxu0 0.0
    %1322 = vmatpush1.msra.mxu0 0.0
    %1323 = vmatprep.subr.mxu0 0.0
    %1324 = vmatpush1.msra.mxu0 0.0
    %1325 = vmatprep.subr.mxu0 0.0
    %1326 = vmatpush1.msra.mxu0 0.0
    %1327 = vmatprep.subr.mxu0 0.0
    %1328 = vmatpush1.msra.mxu0 0.0
    %1329 = vmatprep.subr.mxu0 0.0
    %1330 = vmatpush1.msra.mxu0 0.0
    %1331 = vmatprep.subr.mxu0 0.0
    %1332 = vmatpush1.msra.mxu0 0.0
    %1333 = vmatprep.subr.mxu0 0.0
    %1334 = vmatpush1.msra.mxu0 0.0
    %1335 = vmatprep.subr.mxu0 0.0
    %1336 = vmatpush1.msra.mxu0 0.0
    %1337 = vmatprep.subr.mxu0 0.0
    %1338 = vmatpush1.msra.mxu0 0.0
    %1339 = vmatprep.subr.mxu0 0.0
    %1340 = vmatpush1.msra.mxu0 0.0
    %1341 = vmatprep.subr.mxu0 0.0
    %1342 = vmatpush1.msra.mxu0 0.0
    %1343 = vmatprep.subr.mxu0 0.0
    %1344 = vmatpush1.msra.mxu0 0.0
    %1345 = vmatprep.subr.mxu0 0.0
    %1346 = vmatpush1.msra.mxu0 %v1262
    %1347 = vmatprep.subr.mxu0 0.0
    %1348 = vmatpush2.msra.mxu0 0.0
    %1349 = vmatprep.subr.mxu0 0.0
    %1350 = vmatpush2.msra.mxu0 0.0
    %1351 = vmatprep.subr.mxu0 0.0
    %1352 = vmatpush2.msra.mxu0 0.0
    %1353 = vmatprep.subr.mxu0 0.0
    %1354 = vmatpush2.msra.mxu0 0.0
    %1355 = vmatprep.subr.mxu0 0.0
    %1356 = vmatpush2.msra.mxu0 0.0
    %1357 = vmatprep.subr.mxu0 0.0
    %1358 = vmatpush2.msra.mxu0 0.0
    %1359 = vmatprep.subr.mxu0 0.0
    %1360 = vmatpush2.msra.mxu0 0.0
    %1361 = vmatprep.subr.mxu0 0.0
    %1362 = vmatpush2.msra.mxu0 0.0
    %1363 = vmatprep.subr.mxu0 0.0
    %1364 = vmatpush2.msra.mxu0 0.0
    %1365 = vmatprep.subr.mxu0 0.0
    %1366 = vmatpush2.msra.mxu0 0.0
    %1367 = vmatprep.subr.mxu0 0.0
    %1368 = vmatpush2.msra.mxu0 0.0
    %1369 = vmatprep.subr.mxu0 0.0
    %1370 = vmatpush2.msra.mxu0 0.0
    %1371 = vmatprep.subr.mxu0 0.0
    %1372 = vmatpush2.msra.mxu0 0.0
    %1373 = vmatprep.subr.mxu0 0.0
    %1374 = vmatpush2.msra.mxu0 0.0
    %1375 = vmatprep.subr.mxu0 0.0
    %1376 = vmatpush2.msra.mxu0 0.0
    %1377 = vmatprep.subr.mxu0 0.0
    %1378 = vmatpush2.msra.mxu0 0.0
    %1379 = vmatprep.mubr.f32.mxu0 0.0
    %1380 = vmatmul.mubr.f32.gmra.mxu0 %v1307
    %v1381 = vpop.f32.mrf.mxu0
    %v1382 = vadd.f32 %v1293, %v1381
    %v1383 = vpop.f32.mrf.mxu0
    %1384 = vmatprep.mubr.f32.mxu0 0.0
    %1385 = vmatmul.mubr.f32.gmra.mxu0 %v1309
    %v1386 = vpop.f32.mrf.mxu0
    %v1387 = vadd.f32 %v1293, %v1386
    %v1388 = vpop.f32.mrf.mxu0
    %1389 = vmatprep.mubr.f32.mxu0 0.0
    %1390 = vmatmul.mubr.f32.gmra.mxu0 %v1311
    %v1391 = vpop.f32.mrf.mxu0
    %v1392 = vadd.f32 %v1293, %v1391
    %v1393 = vpop.f32.mrf.mxu0
    %1394 = vmatprep.mubr.f32.mxu0 0.0
    %1395 = vmatmul.mubr.f32.gmra.mxu0 %v1313
    %v1396 = vpop.f32.mrf.mxu0
    %v1397 = vadd.f32 %v1293, %v1396
    %v1398 = vpop.f32.mrf.mxu0
    %1399 = vdwg.mxu0
    %1400 = vmatprep.subr.mxu0 0.0
    %1401 = vmatpush1.msra.mxu0 0.0
    %1402 = vmatprep.subr.mxu0 0.0
    %1403 = vmatpush1.msra.mxu0 0.0
    %1404 = vmatprep.subr.mxu0 0.0
    %1405 = vmatpush1.msra.mxu0 0.0
    %1406 = vmatprep.subr.mxu0 0.0
    %1407 = vmatpush1.msra.mxu0 0.0
    %1408 = vmatprep.subr.mxu0 0.0
    %1409 = vmatpush1.msra.mxu0 0.0
    %1410 = vmatprep.subr.mxu0 0.0
    %1411 = vmatpush1.msra.mxu0 0.0
    %1412 = vmatprep.subr.mxu0 0.0
    %1413 = vmatpush1.msra.mxu0 0.0
    %1414 = vmatprep.subr.mxu0 0.0
    %1415 = vmatpush1.msra.mxu0 0.0
    %1416 = vmatprep.subr.mxu0 0.0
    %1417 = vmatpush1.msra.mxu0 0.0
    %1418 = vmatprep.subr.mxu0 0.0
    %1419 = vmatpush1.msra.mxu0 0.0
    %1420 = vmatprep.subr.mxu0 0.0
    %1421 = vmatpush1.msra.mxu0 0.0
    %1422 = vmatprep.subr.mxu0 0.0
    %1423 = vmatpush1.msra.mxu0 0.0
    %1424 = vmatprep.subr.mxu0 0.0
    %1425 = vmatpush1.msra.mxu0 0.0
    %1426 = vmatprep.subr.mxu0 0.0
    %1427 = vmatpush1.msra.mxu0 0.0
    %1428 = vmatprep.subr.mxu0 0.0
    %1429 = vmatpush1.msra.mxu0 0.0
    %1430 = vmatprep.subr.mxu0 0.0
    %1431 = vmatpush1.msra.mxu0 %v1263
    %1432 = vmatprep.subr.mxu0 0.0
    %1433 = vmatpush2.msra.mxu0 0.0
    %1434 = vmatprep.subr.mxu0 0.0
    %1435 = vmatpush2.msra.mxu0 0.0
    %1436 = vmatprep.subr.mxu0 0.0
    %1437 = vmatpush2.msra.mxu0 0.0
    %1438 = vmatprep.subr.mxu0 0.0
    %1439 = vmatpush2.msra.mxu0 0.0
    %1440 = vmatprep.subr.mxu0 0.0
    %1441 = vmatpush2.msra.mxu0 0.0
    %1442 = vmatprep.subr.mxu0 0.0
    %1443 = vmatpush2.msra.mxu0 0.0
    %1444 = vmatprep.subr.mxu0 0.0
    %1445 = vmatpush2.msra.mxu0 0.0
    %1446 = vmatprep.subr.mxu0 0.0
    %1447 = vmatpush2.msra.mxu0 0.0
    %1448 = vmatprep.subr.mxu0 0.0
    %1449 = vmatpush2.msra.mxu0 0.0
    %1450 = vmatprep.subr.mxu0 0.0
    %1451 = vmatpush2.msra.mxu0 0.0
    %1452 = vmatprep.subr.mxu0 0.0
    %1453 = vmatpush2.msra.mxu0 0.0
    %1454 = vmatprep.subr.mxu0 0.0
    %1455 = vmatpush2.msra.mxu0 0.0
    %1456 = vmatprep.subr.mxu0 0.0
    %1457 = vmatpush2.msra.mxu0 0.0
    %1458 = vmatprep.subr.mxu0 0.0
    %1459 = vmatpush2.msra.mxu0 0.0
    %1460 = vmatprep.subr.mxu0 0.0
    %1461 = vmatpush2.msra.mxu0 0.0
    %1462 = vmatprep.subr.mxu0 0.0
    %1463 = vmatpush2.msra.mxu0 0.0
    %1464 = vmatprep.mubr.f32.mxu0 0.0
    %1465 = vmatmul.mubr.f32.gmra.mxu0 %v865
    %v1466 = vpop.f32.mrf.mxu0
    %v1467 = vadd.f32 0.0, %v1466
    %v1468 = vpop.f32.mrf.mxu0
    %1469 = vdwg.mxu0
    %v1470 = vadd.f32 %v1382, %v1467
    %v1471 = vxor.u32 %v1470, 2147483648
    %v1472 = vmul.f32 %v1471, 1.442695
    %v1473 = vpow.pop %v1472
    %v1474 = vadd.f32 %v1473, 1.0
    %v1475 = vrcp.pop %v1474
    %v1476 = vmul.f32 1.0, %v1475
    %v1477 = vtanh.pop %v1470
    %v1478 = vmul.f32 %v1476, 0.0
    %1480 = vrot.lane.b32.xlu0 %v1477, 104
    %v1481 = vpop.permute.xlu0 %1480
    %v1483 = vmul.f32 %v1476, %v1481
    %1485 = vrot.lane.b32.xlu0 %v1483, 8
    %v1486 = vpop.permute.xlu0 %1485
    %v1488 = vadd.f32 %v1478, %v1486
    %v1489 = vtanh.pop %v1488
    %1491 = vrot.lane.b32.xlu0 %v1489, 8
    %v1492 = vpop.permute.xlu0 %1491
    %v1494 = vmul.f32 %v1476, %v1492
    %1496 = vrot.lane.b32.xlu0 %v1494, 112
    %v1497 = vpop.permute.xlu0 %1496
    %v1498 = vsel %vm254, %v1497, 0
    %1500 = vmatprep.subr.mxu0 0.0
    %1501 = vmatpush1.msra.mxu0 0.0
    %1502 = vmatprep.subr.mxu0 0.0
    %1503 = vmatpush1.msra.mxu0 0.0
    %1504 = vmatprep.subr.mxu0 0.0
    %1505 = vmatpush1.msra.mxu0 0.0
    %1506 = vmatprep.subr.mxu0 0.0
    %1507 = vmatpush1.msra.mxu0 0.0
    %1508 = vmatprep.subr.mxu0 0.0
    %1509 = vmatpush1.msra.mxu0 0.0
    %1510 = vmatprep.subr.mxu0 0.0
    %1511 = vmatpush1.msra.mxu0 0.0
    %1512 = vmatprep.subr.mxu0 0.0
    %1513 = vmatpush1.msra.mxu0 0.0
    %1514 = vmatprep.subr.mxu0 0.0
    %1515 = vmatpush1.msra.mxu0 0.0
    %1516 = vmatprep.subr.mxu0 0.0
    %1517 = vmatpush1.msra.mxu0 0.0
    %1518 = vmatprep.subr.mxu0 0.0
    %1519 = vmatpush1.msra.mxu0 0.0
    %1520 = vmatprep.subr.mxu0 0.0
    %1521 = vmatpush1.msra.mxu0 0.0
    %1522 = vmatprep.subr.mxu0 0.0
    %1523 = vmatpush1.msra.mxu0 0.0
    %1524 = vmatprep.subr.mxu0 0.0
    %1525 = vmatpush1.msra.mxu0 0.0
    %1526 = vmatprep.subr.mxu0 0.0
    %1527 = vmatpush1.msra.mxu0 0.0
    %1528 = vmatprep.subr.mxu0 0.0
    %1529 = vmatpush1.msra.mxu0 0.0
    %1530 = vmatprep.subr.mxu0 0.0
    %1531 = vmatpush1.msra.mxu0 %v1263
    %1532 = vmatprep.subr.mxu0 0.0
    %1533 = vmatpush2.msra.mxu0 0.0
    %1534 = vmatprep.subr.mxu0 0.0
    %1535 = vmatpush2.msra.mxu0 0.0
    %1536 = vmatprep.subr.mxu0 0.0
    %1537 = vmatpush2.msra.mxu0 0.0
    %1538 = vmatprep.subr.mxu0 0.0
    %1539 = vmatpush2.msra.mxu0 0.0
    %1540 = vmatprep.subr.mxu0 0.0
    %1541 = vmatpush2.msra.mxu0 0.0
    %1542 = vmatprep.subr.mxu0 0.0
    %1543 = vmatpush2.msra.mxu0 0.0
    %1544 = vmatprep.subr.mxu0 0.0
    %1545 = vmatpush2.msra.mxu0 0.0
    %1546 = vmatprep.subr.mxu0 0.0
    %1547 = vmatpush2.msra.mxu0 0.0
    %1548 = vmatprep.subr.mxu0 0.0
    %1549 = vmatpush2.msra.mxu0 0.0
    %1550 = vmatprep.subr.mxu0 0.0
    %1551 = vmatpush2.msra.mxu0 0.0
    %1552 = vmatprep.subr.mxu0 0.0
    %1553 = vmatpush2.msra.mxu0 0.0
    %1554 = vmatprep.subr.mxu0 0.0
    %1555 = vmatpush2.msra.mxu0 0.0
    %1556 = vmatprep.subr.mxu0 0.0
    %1557 = vmatpush2.msra.mxu0 0.0
    %1558 = vmatprep.subr.mxu0 0.0
    %1559 = vmatpush2.msra.mxu0 0.0
    %1560 = vmatprep.subr.mxu0 0.0
    %1561 = vmatpush2.msra.mxu0 0.0
    %1562 = vmatprep.subr.mxu0 0.0
    %1563 = vmatpush2.msra.mxu0 0.0
    %1564 = vmatprep.mubr.f32.mxu0 0.0
    %1565 = vmatmul.mubr.f32.gmra.mxu0 %v1498
    %v1566 = vpop.f32.mrf.mxu0
    %v1567 = vadd.f32 0.0, %v1566
    %v1568 = vpop.f32.mrf.mxu0
    %1569 = vdwg.mxu0
    %v1570 = vadd.f32 %v1387, %v1567
    %v1571 = vxor.u32 %v1570, 2147483648
    %v1572 = vmul.f32 %v1571, 1.442695
    %v1573 = vpow.pop %v1572
    %v1574 = vadd.f32 %v1573, 1.0
    %v1575 = vrcp.pop %v1574
    %v1576 = vmul.f32 1.0, %v1575
    %v1577 = vtanh.pop %v1570
    %v1578 = vmul.f32 %v1576, %v1488
    %1580 = vrot.lane.b32.xlu0 %v1577, 104
    %v1581 = vpop.permute.xlu0 %1580
    %v1583 = vmul.f32 %v1576, %v1581
    %1585 = vrot.lane.b32.xlu0 %v1583, 8
    %v1586 = vpop.permute.xlu0 %1585
    %v1588 = vadd.f32 %v1578, %v1586
    %v1589 = vtanh.pop %v1588
    %1591 = vrot.lane.b32.xlu0 %v1589, 8
    %v1592 = vpop.permute.xlu0 %1591
    %v1594 = vmul.f32 %v1576, %v1592
    %1596 = vrot.lane.b32.xlu0 %v1594, 112
    %v1597 = vpop.permute.xlu0 %1596
    %v1598 = vsel %vm254, %v1597, 0
    %1600 = vmatprep.subr.mxu0 0.0
    %1601 = vmatpush1.msra.mxu0 0.0
    %1602 = vmatprep.subr.mxu0 0.0
    %1603 = vmatpush1.msra.mxu0 0.0
    %1604 = vmatprep.subr.mxu0 0.0
    %1605 = vmatpush1.msra.mxu0 0.0
    %1606 = vmatprep.subr.mxu0 0.0
    %1607 = vmatpush1.msra.mxu0 0.0
    %1608 = vmatprep.subr.mxu0 0.0
    %1609 = vmatpush1.msra.mxu0 0.0
    %1610 = vmatprep.subr.mxu0 0.0
    %1611 = vmatpush1.msra.mxu0 0.0
    %1612 = vmatprep.subr.mxu0 0.0
    %1613 = vmatpush1.msra.mxu0 0.0
    %1614 = vmatprep.subr.mxu0 0.0
    %1615 = vmatpush1.msra.mxu0 0.0
    %1616 = vmatprep.subr.mxu0 0.0
    %1617 = vmatpush1.msra.mxu0 0.0
    %1618 = vmatprep.subr.mxu0 0.0
    %1619 = vmatpush1.msra.mxu0 0.0
    %1620 = vmatprep.subr.mxu0 0.0
    %1621 = vmatpush1.msra.mxu0 0.0
    %1622 = vmatprep.subr.mxu0 0.0
    %1623 = vmatpush1.msra.mxu0 0.0
    %1624 = vmatprep.subr.mxu0 0.0
    %1625 = vmatpush1.msra.mxu0 0.0
    %1626 = vmatprep.subr.mxu0 0.0
    %1627 = vmatpush1.msra.mxu0 0.0
    %1628 = vmatprep.subr.mxu0 0.0
    %1629 = vmatpush1.msra.mxu0 0.0
    %1630 = vmatprep.subr.mxu0 0.0
    %1631 = vmatpush1.msra.mxu0 %v1263
    %1632 = vmatprep.subr.mxu0 0.0
    %1633 = vmatpush2.msra.mxu0 0.0
    %1634 = vmatprep.subr.mxu0 0.0
    %1635 = vmatpush2.msra.mxu0 0.0
    %1636 = vmatprep.subr.mxu0 0.0
    %1637 = vmatpush2.msra.mxu0 0.0
    %1638 = vmatprep.subr.mxu0 0.0
    %1639 = vmatpush2.msra.mxu0 0.0
    %1640 = vmatprep.subr.mxu0 0.0
    %1641 = vmatpush2.msra.mxu0 0.0
    %1642 = vmatprep.subr.mxu0 0.0
    %1643 = vmatpush2.msra.mxu0 0.0
    %1644 = vmatprep.subr.mxu0 0.0
    %1645 = vmatpush2.msra.mxu0 0.0
    %1646 = vmatprep.subr.mxu0 0.0
    %1647 = vmatpush2.msra.mxu0 0.0
    %1648 = vmatprep.subr.mxu0 0.0
    %1649 = vmatpush2.msra.mxu0 0.0
    %1650 = vmatprep.subr.mxu0 0.0
    %1651 = vmatpush2.msra.mxu0 0.0
    %1652 = vmatprep.subr.mxu0 0.0
    %1653 = vmatpush2.msra.mxu0 0.0
    %1654 = vmatprep.subr.mxu0 0.0
    %1655 = vmatpush2.msra.mxu0 0.0
    %1656 = vmatprep.subr.mxu0 0.0
    %1657 = vmatpush2.msra.mxu0 0.0
    %1658 = vmatprep.subr.mxu0 0.0
    %1659 = vmatpush2.msra.mxu0 0.0
    %1660 = vmatprep.subr.mxu0 0.0
    %1661 = vmatpush2.msra.mxu0 0.0
    %1662 = vmatprep.subr.mxu0 0.0
    %1663 = vmatpush2.msra.mxu0 0.0
    %1664 = vmatprep.mubr.f32.mxu0 0.0
    %1665 = vmatmul.mubr.f32.gmra.mxu0 %v1598
    %v1666 = vpop.f32.mrf.mxu0
    %v1667 = vadd.f32 0.0, %v1666
    %v1668 = vpop.f32.mrf.mxu0
    %1669 = vdwg.mxu0
    %v1670 = vadd.f32 %v1392, %v1667
    %v1671 = vxor.u32 %v1670, 2147483648
    %v1672 = vmul.f32 %v1671, 1.442695
    %v1673 = vpow.pop %v1672
    %v1674 = vadd.f32 %v1673, 1.0
    %v1675 = vrcp.pop %v1674
    %v1676 = vmul.f32 1.0, %v1675
    %v1677 = vtanh.pop %v1670
    %v1678 = vmul.f32 %v1676, %v1588
    %1680 = vrot.lane.b32.xlu0 %v1677, 104
    %v1681 = vpop.permute.xlu0 %1680
    %v1683 = vmul.f32 %v1676, %v1681
    %1685 = vrot.lane.b32.xlu0 %v1683, 8
    %v1686 = vpop.permute.xlu0 %1685
    %v1688 = vadd.f32 %v1678, %v1686
    %v1689 = vtanh.pop %v1688
    %1691 = vrot.lane.b32.xlu0 %v1689, 8
    %v1692 = vpop.permute.xlu0 %1691
    %v1694 = vmul.f32 %v1676, %v1692
    %1696 = vrot.lane.b32.xlu0 %v1694, 112
    %v1697 = vpop.permute.xlu0 %1696
    %v1698 = vsel %vm254, %v1697, 0
    %1700 = vmatprep.subr.mxu0 0.0
    %1701 = vmatpush1.msra.mxu0 0.0
    %1702 = vmatprep.subr.mxu0 0.0
    %1703 = vmatpush1.msra.mxu0 0.0
    %1704 = vmatprep.subr.mxu0 0.0
    %1705 = vmatpush1.msra.mxu0 0.0
    %1706 = vmatprep.subr.mxu0 0.0
    %1707 = vmatpush1.msra.mxu0 0.0
    %1708 = vmatprep.subr.mxu0 0.0
    %1709 = vmatpush1.msra.mxu0 0.0
    %1710 = vmatprep.subr.mxu0 0.0
    %1711 = vmatpush1.msra.mxu0 0.0
    %1712 = vmatprep.subr.mxu0 0.0
    %1713 = vmatpush1.msra.mxu0 0.0
    %1714 = vmatprep.subr.mxu0 0.0
    %1715 = vmatpush1.msra.mxu0 0.0
    %1716 = vmatprep.subr.mxu0 0.0
    %1717 = vmatpush1.msra.mxu0 0.0
    %1718 = vmatprep.subr.mxu0 0.0
    %1719 = vmatpush1.msra.mxu0 0.0
    %1720 = vmatprep.subr.mxu0 0.0
    %1721 = vmatpush1.msra.mxu0 0.0
    %1722 = vmatprep.subr.mxu0 0.0
    %1723 = vmatpush1.msra.mxu0 0.0
    %1724 = vmatprep.subr.mxu0 0.0
    %1725 = vmatpush1.msra.mxu0 0.0
    %1726 = vmatprep.subr.mxu0 0.0
    %1727 = vmatpush1.msra.mxu0 0.0
    %1728 = vmatprep.subr.mxu0 0.0
    %1729 = vmatpush1.msra.mxu0 0.0
    %1730 = vmatprep.subr.mxu0 0.0
    %1731 = vmatpush1.msra.mxu0 %v1263
    %1732 = vmatprep.subr.mxu0 0.0
    %1733 = vmatpush2.msra.mxu0 0.0
    %1734 = vmatprep.subr.mxu0 0.0
    %1735 = vmatpush2.msra.mxu0 0.0
    %1736 = vmatprep.subr.mxu0 0.0
    %1737 = vmatpush2.msra.mxu0 0.0
    %1738 = vmatprep.subr.mxu0 0.0
    %1739 = vmatpush2.msra.mxu0 0.0
    %1740 = vmatprep.subr.mxu0 0.0
    %1741 = vmatpush2.msra.mxu0 0.0
    %1742 = vmatprep.subr.mxu0 0.0
    %1743 = vmatpush2.msra.mxu0 0.0
    %1744 = vmatprep.subr.mxu0 0.0
    %1745 = vmatpush2.msra.mxu0 0.0
    %1746 = vmatprep.subr.mxu0 0.0
    %1747 = vmatpush2.msra.mxu0 0.0
    %1748 = vmatprep.subr.mxu0 0.0
    %1749 = vmatpush2.msra.mxu0 0.0
    %1750 = vmatprep.subr.mxu0 0.0
    %1751 = vmatpush2.msra.mxu0 0.0
    %1752 = vmatprep.subr.mxu0 0.0
    %1753 = vmatpush2.msra.mxu0 0.0
    %1754 = vmatprep.subr.mxu0 0.0
    %1755 = vmatpush2.msra.mxu0 0.0
    %1756 = vmatprep.subr.mxu0 0.0
    %1757 = vmatpush2.msra.mxu0 0.0
    %1758 = vmatprep.subr.mxu0 0.0
    %1759 = vmatpush2.msra.mxu0 0.0
    %1760 = vmatprep.subr.mxu0 0.0
    %1761 = vmatpush2.msra.mxu0 0.0
    %1762 = vmatprep.subr.mxu0 0.0
    %1763 = vmatpush2.msra.mxu0 0.0
    %1764 = vmatprep.mubr.f32.mxu0 0.0
    %1765 = vmatmul.mubr.f32.gmra.mxu0 %v1698
    %v1766 = vpop.f32.mrf.mxu0
    %v1767 = vadd.f32 0.0, %v1766
    %v1768 = vpop.f32.mrf.mxu0
    %1769 = vdwg.mxu0
    %v1770 = vadd.f32 %v1397, %v1767
    %v1771 = vxor.u32 %v1770, 2147483648
    %v1772 = vmul.f32 %v1771, 1.442695
    %v1773 = vpow.pop %v1772
    %v1774 = vadd.f32 %v1773, 1.0
    %v1775 = vrcp.pop %v1774
    %v1776 = vmul.f32 1.0, %v1775
    %v1777 = vtanh.pop %v1770
    %v1778 = vmul.f32 %v1776, %v1688
    %1780 = vrot.lane.b32.xlu0 %v1777, 104
    %v1781 = vpop.permute.xlu0 %1780
    %v1783 = vmul.f32 %v1776, %v1781
    %1785 = vrot.lane.b32.xlu0 %v1783, 8
    %v1786 = vpop.permute.xlu0 %1785
    %v1788 = vadd.f32 %v1778, %v1786
    %v1789 = vtanh.pop %v1788
    %1791 = vrot.lane.b32.xlu0 %v1789, 8
    %v1792 = vpop.permute.xlu0 %1791
    %v1794 = vmul.f32 %v1776, %v1792
    %v1795 = vld [vmem:[%s10] sm:$0xff]
    %1797 = vrot.lane.b32.xlu0 %v1794, 112
    %v1798 = vpop.permute.xlu0 %1797
    %v1799 = vsel %vm254, %v1798, 0
    %1801 = vmatprep.subr.mxu0 0.0
    %1802 = vmatpush1.msra.mxu0 0.0
    %1803 = vmatprep.subr.mxu0 0.0
    %1804 = vmatpush1.msra.mxu0 0.0
    %1805 = vmatprep.subr.mxu0 0.0
    %1806 = vmatpush1.msra.mxu0 0.0
    %1807 = vmatprep.subr.mxu0 0.0
    %1808 = vmatpush1.msra.mxu0 0.0
    %1809 = vmatprep.subr.mxu0 0.0
    %1810 = vmatpush1.msra.mxu0 0.0
    %1811 = vmatprep.subr.mxu0 0.0
    %1812 = vmatpush1.msra.mxu0 0.0
    %1813 = vmatprep.subr.mxu0 0.0
    %1814 = vmatpush1.msra.mxu0 0.0
    %1815 = vmatprep.subr.mxu0 0.0
    %1816 = vmatpush1.msra.mxu0 0.0
    %1817 = vmatprep.subr.mxu0 0.0
    %1818 = vmatpush1.msra.mxu0 0.0
    %1819 = vmatprep.subr.mxu0 0.0
    %1820 = vmatpush1.msra.mxu0 0.0
    %1821 = vmatprep.subr.mxu0 0.0
    %1822 = vmatpush1.msra.mxu0 0.0
    %1823 = vmatprep.subr.mxu0 0.0
    %1824 = vmatpush1.msra.mxu0 0.0
    %1825 = vmatprep.subr.mxu0 0.0
    %1826 = vmatpush1.msra.mxu0 0.0
    %1827 = vmatprep.subr.mxu0 0.0
    %1828 = vmatpush1.msra.mxu0 0.0
    %1829 = vmatprep.subr.mxu0 0.0
    %1830 = vmatpush1.msra.mxu0 0.0
    %1831 = vmatprep.subr.mxu0 0.0
    %1832 = vmatpush1.msra.mxu0 %v1795
    %1833 = vmatprep.subr.mxu0 0.0
    %1834 = vmatpush2.msra.mxu0 0.0
    %1835 = vmatprep.subr.mxu0 0.0
    %1836 = vmatpush2.msra.mxu0 0.0
    %1837 = vmatprep.subr.mxu0 0.0
    %1838 = vmatpush2.msra.mxu0 0.0
    %1839 = vmatprep.subr.mxu0 0.0
    %1840 = vmatpush2.msra.mxu0 0.0
    %1841 = vmatprep.subr.mxu0 0.0
    %1842 = vmatpush2.msra.mxu0 0.0
    %1843 = vmatprep.subr.mxu0 0.0
    %1844 = vmatpush2.msra.mxu0 0.0
    %1845 = vmatprep.subr.mxu0 0.0
    %1846 = vmatpush2.msra.mxu0 0.0
    %1847 = vmatprep.subr.mxu0 0.0
    %1848 = vmatpush2.msra.mxu0 0.0
    %1849 = vmatprep.subr.mxu0 0.0
    %1850 = vmatpush2.msra.mxu0 0.0
    %1851 = vmatprep.subr.mxu0 0.0
    %1852 = vmatpush2.msra.mxu0 0.0
    %1853 = vmatprep.subr.mxu0 0.0
    %1854 = vmatpush2.msra.mxu0 0.0
    %1855 = vmatprep.subr.mxu0 0.0
    %1856 = vmatpush2.msra.mxu0 0.0
    %1857 = vmatprep.subr.mxu0 0.0
    %1858 = vmatpush2.msra.mxu0 0.0
    %1859 = vmatprep.subr.mxu0 0.0
    %1860 = vmatpush2.msra.mxu0 0.0
    %1861 = vmatprep.subr.mxu0 0.0
    %1862 = vmatpush2.msra.mxu0 0.0
    %1863 = vmatprep.subr.mxu0 0.0
    %1864 = vmatpush2.msra.mxu0 0.0
    %1865 = vmatprep.mubr.f32.mxu0 0.0
    %1866 = vmatmul.mubr.f32.gmra.mxu0 %v1498
    %v1867 = vpop.f32.mrf.mxu0
    %v1868 = vadd.f32 0.0, %v1867
    %v1869 = vpop.f32.mrf.mxu0
    %1870 = vmatprep.mubr.f32.mxu0 0.0
    %1871 = vmatmul.mubr.f32.gmra.mxu0 %v1598
    %v1872 = vpop.f32.mrf.mxu0
    %v1873 = vadd.f32 0.0, %v1872
    %v1874 = vpop.f32.mrf.mxu0
    %1875 = vmatprep.mubr.f32.mxu0 0.0
    %1876 = vmatmul.mubr.f32.gmra.mxu0 %v1698
    %v1877 = vpop.f32.mrf.mxu0
    %v1878 = vadd.f32 0.0, %v1877
    %v1879 = vpop.f32.mrf.mxu0
    %1880 = vmatprep.mubr.f32.mxu0 0.0
    %1881 = vmatmul.mubr.f32.gmra.mxu0 %v1799
    %v1882 = vpop.f32.mrf.mxu0
    %v1883 = vadd.f32 0.0, %v1882
    %v1884 = vpop.f32.mrf.mxu0
    %1885 = vdwg.mxu0
    %vm1886 = vcmask 31744
    %1887 = vst.msk [vmem:[%s11] sm:$0xff] %vm1886, %v1868
    %1888 = vst.msk [vmem:[%s11 + $0x8] sm:$0xff] %vm1886, %v1873
    %1889 = vst.msk [vmem:[%s11 + $0x10] sm:$0xff] %vm1886, %v1878
    %1890 = vst.msk [vmem:[%s11 + $0x18] sm:$0xff] %vm1886, %v1883
    // Predicated region
    $region78: #{tpu_custom_call.1} parent=1 // pred_check
      _
    $region79: #{tpu_custom_call.1} parent=1 // pred_check_branch
      %1892 = sbr.rel (0) target = $region81
    $region80: #{tpu_custom_call.1} parent=1 // pred_region
      _
    $region81: #{tpu_custom_call.1} parent=1 // pred_fallthru
      _
    // Predicated region
    $region82: #{tpu_custom_call.1} parent=1 // pred_check
      _
    $region83: #{tpu_custom_call.1} parent=1 // pred_check_branch
      %1894 = sbr.rel (0) target = $region85
    $region84: #{tpu_custom_call.1} parent=1 // pred_region
      _
    $region85: #{tpu_custom_call.1} parent=1 // pred_fallthru
      _
    %1895 = vsyncpa [#allocation3], 1
    %1896 = vsyncpa [#allocation5], 1
    %1897 = vsyncpa [#allocation8], 1
    %1898 = vsyncpa [#allocation11], 1
    %1899 = vsyncpa [#allocation14], 1

</llo_original>
